<compile_context>
chip_gen: v5e
topology: v5e:2x2
jax: 0.10.0
libtpu: 0.0.40
codegen_flags: <defaults>
</compile_context>

<pallas_src>
import functools
import math

import jax
import jax.numpy as jnp
from jax import lax
from jax.experimental import pallas as pl
from jax.experimental.pallas import tpu as pltpu

# ----------------------------- configuration ------------------------------
C_HIDDEN = 32          # D (per-head channels, fixed by the module)
C_S = 64               # c_s  -> H = c_s / 32 = 2 heads
C_Z = 16               # c_z
NO_HEADS = C_S // C_HIDDEN
INF = 1e9
EPS = 1e-5

B = 2                  # batch
S = 16                 # sequence length

# MXU operand dtype.  Keep f32 accumulation + f32 softmax/norm math everywhere.
DOT_DTYPE = jnp.bfloat16


# ------------------------------ Pallas kernel ------------------------------
def _dit_attn_head_kernel(x_ref, emb_ref, wqkv_ref, wo_ref, bias_ref, aux_ref,
                          out_ref, *, batch, seq, d_head, c_s, eps):
    """One grid step == one attention head over the whole flattened (B*S) slab.

    x_ref    : (B*S, c_s)   raw bs (pre-AdaLN), batch flattened into rows, f32
    emb_ref  : (B, 3*c_s)   AdaLN embedding rows [shift | scale | gate], f32
    wqkv_ref : (c_s, 3*D)   this head's [wq_h | wk_h | wv_h] columns, bf16
    wo_ref   : (D, c_s)     this head's output-projection rows, bf16
    bias_ref : (B*S, B*S)   additive bias: z-bias + z_mask + cross-batch -INF
    aux_ref  : (8, c_s)     row0 = gq/sqrt(D) (lanes :D), row1 = gk, row2 = bo/H
    out_ref  : (B*S, c_s)   per-head partial output, gate already applied;
                            summed over heads by the caller.
    """
    x = x_ref[...]                                   # (B*S, c_s) f32
    emb = emb_ref[...]                               # (B, 3*c_s) f32
    aux = aux_ref[...]                               # (8, c_s)   f32
    gq = aux[0:1, :d_head]                           # (1, D), 1/sqrt(D) folded
    gk = aux[1:2, :d_head]                           # (1, D)
    bo = aux[2:3, :]                                 # (1, c_s) = bias / H

    # ---- AdaLayerNormZero: LN (no affine) + per-batch scale/shift (f32) ----
    mu = jnp.mean(x, axis=-1, keepdims=True)
    var = jnp.mean((x - mu) ** 2, axis=-1, keepdims=True)
    ln = (x - mu) * lax.rsqrt(var + eps)

    # Expand the B modulation rows over their S sequence rows (static B).
    mod = jnp.concatenate(
        [jnp.broadcast_to(emb[b:b + 1, :], (seq, 3 * c_s)) for b in range(batch)],
        axis=0)                                      # (B*S, 3*c_s)
    shift = mod[:, 0:c_s]
    scale = mod[:, c_s:2 * c_s]
    gate = mod[:, 2 * c_s:3 * c_s]
    xm = ln * (1.0 + scale) + shift                  # modulated input, f32

    # ---- per-head Q/K/V projection: one MXU dot (bf16 operands, f32 acc) ----
    qkv = jnp.dot(xm.astype(DOT_DTYPE), wqkv_ref[...],
                  preferred_element_type=jnp.float32)          # (B*S, 3D) f32
    q = qkv[:, 0:d_head]
    k = qkv[:, d_head:2 * d_head]
    v = qkv[:, 2 * d_head:3 * d_head]

    # RMSNorm over the head dim (f32); gq carries the 1/sqrt(D) scale.
    q = q * lax.rsqrt(jnp.mean(q * q, axis=-1, keepdims=True) + eps) * gq
    k = k * lax.rsqrt(jnp.mean(k * k, axis=-1, keepdims=True) + eps) * gk

    # ---- batch-collapsed attention: one (B*S, B*S) score matrix per head ----
    # Cross-batch quadrants are already -INF inside bias_ref.
    s = lax.dot_general(q.astype(DOT_DTYPE), k.astype(DOT_DTYPE),
                        dimension_numbers=(((1,), (1,)), ((), ())),
                        preferred_element_type=jnp.float32)     # (B*S, B*S)
    s = s + bias_ref[...]

    m = jnp.max(s, axis=-1, keepdims=True)
    p = jnp.exp(s - m)                               # f32 softmax numerator
    l = jnp.sum(p, axis=-1, keepdims=True)
    ctx = jnp.dot(p.astype(DOT_DTYPE), v.astype(DOT_DTYPE),
                  preferred_element_type=jnp.float32)           # (B*S, D)
    ctx = ctx * pl.reciprocal(l, approx=True)        # EUP slot

    # Output projection for this head (chained f32 accumulation -> MRB-friendly).
    o = jnp.dot(ctx.astype(DOT_DTYPE), wo_ref[...],
                preferred_element_type=jnp.float32)             # (B*S, c_s)

    # Fold bias share and AdaLN gate per head; caller sums the H partials.
    out_ref[...] = (o + bo) * gate


def pallas_dit_attention_core(bs, emb, wqkv_heads, wo_heads, bias_full, aux,
                              *, heads, d_head, eps):
    bsz, seq, c_s = bs.shape
    rows = bsz * seq
    x_flat = bs.reshape(rows, c_s).astype(jnp.float32)
    kernel = functools.partial(_dit_attn_head_kernel, batch=bsz, seq=seq,
                               d_head=d_head, c_s=c_s, eps=eps)
    partial_out = pl.pallas_call(
        kernel,
        out_shape=jax.ShapeDtypeStruct((heads, rows, c_s), jnp.float32),
        grid=(heads,),                       # head axis: parallel (2 TCs on v7x)
        in_specs=[
            pl.BlockSpec((rows, c_s), lambda h: (0, 0)),               # x
            pl.BlockSpec((bsz, 3 * c_s), lambda h: (0, 0)),            # emb
            pl.BlockSpec((None, c_s, 3 * d_head), lambda h: (h, 0, 0)),  # wqkv_h
            pl.BlockSpec((None, d_head, c_s), lambda h: (h, 0, 0)),      # wo_h
            pl.BlockSpec((None, rows, rows), lambda h: (h, 0, 0)),       # bias_h
            pl.BlockSpec((8, c_s), lambda h: (0, 0)),                  # aux
        ],
        out_specs=pl.BlockSpec((None, rows, c_s), lambda h: (h, 0, 0)),
        compiler_params=pltpu.CompilerParams(
            dimension_semantics=("parallel",)),
    )(x_flat, emb, wqkv_heads, wo_heads, bias_full, aux)
    # Single tiny reduce over H=2 gated partials (gate & bias already applied).
    return jnp.sum(partial_out, axis=0).reshape(bsz, seq, c_s)


# ------------------------------ JAX glue (pre/post) -------------------------
def _layernorm(x, eps, weight=None, bias=None):
    mu = jnp.mean(x, axis=-1, keepdims=True)
    var = jnp.mean((x - mu) ** 2, axis=-1, keepdims=True)
    y = (x - mu) / jnp.sqrt(var + eps)
    if weight is not None:
        y = y * weight
    if bias is not None:
        y = y + bias
    return y


def prepare_kernel_params(params):
    """One-time packing of weights into kernel-friendly operands (at init)."""
    c_s, h, d = C_S, NO_HEADS, C_HIDDEN
    wq = params["wq"].reshape(c_s, h, d)
    wk = params["wk"].reshape(c_s, h, d)
    wv = params["wv"].reshape(c_s, h, d)
    # Head-major fused projection: wqkv_heads[h] = [wq_h | wk_h | wv_h], (c_s, 3D)
    wqkv_heads = jnp.concatenate([wq, wk, wv], axis=-1).transpose(1, 0, 2)
    wo_heads = params["wo"].reshape(h, d, c_s)        # (H, D, c_s) row blocks
    aux = jnp.zeros((8, c_s), jnp.float32)
    aux = aux.at[0, :d].set(params["gq"] / math.sqrt(d))   # 1/sqrt(D) folded
    aux = aux.at[1, :d].set(params["gk"])
    aux = aux.at[2, :].set(params["bo"] / h)               # bias split per head
    return {
        "wqkv_heads": wqkv_heads.astype(DOT_DTYPE),
        "wo_heads": wo_heads.astype(DOT_DTYPE),
        "aux": aux,
    }


def dit_attention_forward(params, kparams, bs, z, t, z_mask, *, inf=INF,
                          eps=EPS, use_pallas=True):
    """Reproduces DiTAttention.forward (beta=None)."""
    bsz, seq, c_s = bs.shape
    h, d = NO_HEADS, C_HIDDEN

    # AdaLN embedding: one fused matmul; modulation/gating happens in-kernel.
    emb = jax.nn.silu(t) @ params["ada_w"] + params["ada_b"]       # [B, 3*c_s]

    # Pair bias: LayerNorm(c_z) on z + linear_z, plus the z_mask -INF bias.
    z_norm = _layernorm(z, eps, params["lnz_w"], params["lnz_b"])  # [S, S, c_z]
    z_bias = jnp.einsum("ijc,ch->hij", z_norm, params["wz"])       # [H, S, S]
    mask_bias = jnp.where(z_mask > 0.5, 0.0, -inf)                 # [S, S]
    bias_hss = (z_bias + mask_bias[None]).astype(jnp.float32)      # [H, S, S]

    if use_pallas:
        rows = bsz * seq
        # Full (H, B*S, B*S) bias with -INF cross-batch quadrants so the kernel
        # runs one batch-collapsed score matmul per head (host-side build).
        batch_of_row = jnp.arange(rows) // seq
        same_batch = batch_of_row[:, None] == batch_of_row[None, :]
        bias_full = jnp.where(same_batch[None],
                              jnp.tile(bias_hss, (1, bsz, bsz)),
                              -inf).astype(jnp.float32)            # [H, BS, BS]
        return pallas_dit_attention_core(
            bs.astype(jnp.float32), emb.astype(jnp.float32),
            kparams["wqkv_heads"], kparams["wo_heads"], bias_full,
            kparams["aux"], heads=h, d_head=d, eps=eps)

    # --- pure-JAX f32 reference (for verification) ---
    shift, scale_, gate = jnp.split(emb, 3, axis=-1)
    bs_norm = _layernorm(bs, eps) * (1.0 + scale_[:, None]) + shift[:, None]
    q = (bs_norm @ params["wq"]).reshape(bsz, seq, h, d).transpose(0, 2, 1, 3)
    k = (bs_norm @ params["wk"]).reshape(bsz, seq, h, d).transpose(0, 2, 1, 3)
    v = (bs_norm @ params["wv"]).reshape(bsz, seq, h, d).transpose(0, 2, 1, 3)
    q = q * jax.lax.rsqrt(jnp.mean(q * q, -1, keepdims=True) + eps) * params["gq"]
    k = k * jax.lax.rsqrt(jnp.mean(k * k, -1, keepdims=True) + eps) * params["gk"]
    logits = jnp.einsum("bhqd,bhkd->bhqk", q, k) / math.sqrt(d)
    logits = logits + bias_hss[None]
    w = jax.nn.softmax(logits, axis=-1)
    attn = jnp.einsum("bhqk,bhkd->bhqd", w, v)
    o = attn.transpose(0, 2, 1, 3).reshape(bsz, seq, c_s)
    o = o @ params["wo"] + params["bo"]
    return o * gate[:, None, :]


# ------------------------------ parameter init ------------------------------
def init_params(key):
    ks = jax.random.split(key, 10)
    n = lambda k, shp, sc=0.05: (sc * jax.random.normal(k, shp)).astype(jnp.float32)
    return {
        "ada_w": n(ks[0], (C_S, 3 * C_S)),
        "ada_b": n(ks[1], (3 * C_S,)),
        "lnz_w": 1.0 + n(ks[2], (C_Z,)),
        "lnz_b": n(ks[3], (C_Z,)),
        "wq": n(ks[4], (C_S, C_S)),
        "wk": n(ks[5], (C_S, C_S)),
        "wv": n(ks[6], (C_S, C_S)),
        "wz": n(ks[7], (C_Z, NO_HEADS)),
        "gq": 1.0 + n(ks[8], (C_HIDDEN,)),
        "gk": 1.0 + n(ks[9], (C_HIDDEN,)),
        "wo": n(jax.random.fold_in(key, 100), (C_S, C_S)),
        "bo": n(jax.random.fold_in(key, 101), (C_S,)),
    }


# ----------------------------------- main -----------------------------------
if __name__ == "__main__":
    key = jax.random.PRNGKey(0)
    k_bs, k_z, k_t, k_m, k_p = jax.random.split(key, 5)

    bs = jax.random.normal(k_bs, (B, S, C_S), dtype=jnp.float32)
    z = jax.random.normal(k_z, (S, S, C_Z), dtype=jnp.float32)
    t = jax.random.normal(k_t, (B, C_S), dtype=jnp.float32)
    z_mask = (jax.random.uniform(k_m, (S, S)) > 0.2).astype(jnp.float32)
    # keep the diagonal unmasked so every row has at least one valid key
    z_mask = jnp.maximum(z_mask, jnp.eye(S, dtype=jnp.float32))

    params = init_params(k_p)
    kparams = prepare_kernel_params(params)          # packed once, not per call

    fwd = jax.jit(functools.partial(dit_attention_forward, use_pallas=True))
    out = jax.block_until_ready(fwd(params, kparams, bs, z, t, z_mask))

    ref = dit_attention_forward(params, kparams, bs, z, t, z_mask,
                                use_pallas=False)
    ref = jax.block_until_ready(ref)

    assert out.shape == (B, S, C_S)
    # Tolerance budget: bf16 MXU operands and the approximate EUP reciprocal in
    # the softmax denominator vs. the pure-f32 XLA reference.
    max_err = float(jnp.max(jnp.abs(out - ref)))
    assert jnp.allclose(out, ref, atol=1e-2, rtol=1e-2), max_err
    print("KERNEL_OK")
</pallas_src>

<mosaic_0001>
module attributes {stable_mosaic.version = 11 : i64} {
  func.func @_dit_attn_head_kernel(%arg0: i32, %arg1: memref<32x64xf32, #tpu.memory_space<vmem>>, %arg2: memref<2x192xf32, #tpu.memory_space<vmem>>, %arg3: memref<1x64x96xbf16, #tpu.memory_space<vmem>>, %arg4: memref<1x32x64xbf16, #tpu.memory_space<vmem>>, %arg5: memref<1x32x32xf32, #tpu.memory_space<vmem>>, %arg6: memref<8x64xf32, #tpu.memory_space<vmem>>, %arg7: memref<1x32x64xf32, #tpu.memory_space<vmem>>) attributes {dimension_semantics = [#tpu.dimension_semantics<parallel>], iteration_bounds = array<i64: 2>, scalar_prefetch = 0 : i64, scratch_operands = 0 : i64, tpu.core_type = #tpu.core_type<tc>, window_params = [{pipeline_mode = #tpu.pipeline_mode<synchronous>, transform_indices = @transform_0, window_bounds = array<i64: 32, 64>}, {pipeline_mode = #tpu.pipeline_mode<synchronous>, transform_indices = @transform_1, window_bounds = array<i64: 2, 192>}, {transform_indices = @transform_2, window_bounds = array<i64: 1, 64, 96>}, {transform_indices = @transform_3, window_bounds = array<i64: 1, 32, 64>}, {transform_indices = @transform_4, window_bounds = array<i64: 1, 32, 32>}, {pipeline_mode = #tpu.pipeline_mode<synchronous>, transform_indices = @transform_5, window_bounds = array<i64: 8, 64>}, {transform_indices = @transform_6, window_bounds = array<i64: 1, 32, 64>}]} {
    %c0 = arith.constant 0 : index
    %c0_0 = arith.constant 0 : index
    %0 = vector.load %arg1[%c0, %c0_0] : memref<32x64xf32, #tpu.memory_space<vmem>>, vector<32x64xf32>
    %c0_1 = arith.constant 0 : index
    %c0_2 = arith.constant 0 : index
    %1 = vector.load %arg2[%c0_1, %c0_2] : memref<2x192xf32, #tpu.memory_space<vmem>>, vector<2x192xf32>
    %c0_3 = arith.constant 0 : index
    %c0_4 = arith.constant 0 : index
    %2 = vector.load %arg6[%c0_3, %c0_4] : memref<8x64xf32, #tpu.memory_space<vmem>>, vector<8x64xf32>
    %3 = vector.extract_strided_slice %2 {offsets = [0, 0], sizes = [1, 32], strides = [1, 1]} : vector<8x64xf32> to vector<1x32xf32>
    %4 = vector.extract_strided_slice %2 {offsets = [1, 0], sizes = [1, 32], strides = [1, 1]} : vector<8x64xf32> to vector<1x32xf32>
    %5 = vector.extract_strided_slice %2 {offsets = [2, 0], sizes = [1, 64], strides = [1, 1]} : vector<8x64xf32> to vector<1x64xf32>
    %cst = arith.constant dense<0.000000e+00> : vector<32xf32>
    %6 = vector.multi_reduction <add>, %0, %cst [1] : vector<32x64xf32> to vector<32xf32>
    %7 = vector.shape_cast %6 : vector<32xf32> to vector<32x1xf32>
    %cst_5 = arith.constant 6.400000e+01 : f32
    %8 = vector.broadcast %cst_5 : f32 to vector<32x1xf32>
    %9 = arith.divf %7, %8 : vector<32x1xf32>
    %10 = vector.broadcast %9 : vector<32x1xf32> to vector<32x64xf32>
    %11 = arith.subf %0, %10 : vector<32x64xf32>
    %12 = arith.mulf %11, %11 : vector<32x64xf32>
    %cst_6 = arith.constant dense<0.000000e+00> : vector<32xf32>
    %13 = vector.multi_reduction <add>, %12, %cst_6 [1] : vector<32x64xf32> to vector<32xf32>
    %14 = vector.shape_cast %13 : vector<32xf32> to vector<32x1xf32>
    %cst_7 = arith.constant 6.400000e+01 : f32
    %15 = vector.broadcast %cst_7 : f32 to vector<32x1xf32>
    %16 = arith.divf %14, %15 : vector<32x1xf32>
    %17 = vector.broadcast %9 : vector<32x1xf32> to vector<32x64xf32>
    %18 = arith.subf %0, %17 : vector<32x64xf32>
    %cst_8 = arith.constant 9.99999974E-6 : f32
    %19 = vector.broadcast %cst_8 : f32 to vector<32x1xf32>
    %20 = arith.addf %16, %19 : vector<32x1xf32>
    %21 = math.rsqrt %20 : vector<32x1xf32>
    %22 = vector.broadcast %21 : vector<32x1xf32> to vector<32x64xf32>
    %23 = arith.mulf %18, %22 : vector<32x64xf32>
    %24 = vector.extract_strided_slice %1 {offsets = [0, 0], sizes = [1, 192], strides = [1, 1]} : vector<2x192xf32> to vector<1x192xf32>
    %25 = vector.shape_cast %24 : vector<1x192xf32> to vector<1x192xf32>
    %26 = vector.broadcast %25 : vector<1x192xf32> to vector<16x192xf32>
    %27 = vector.extract_strided_slice %1 {offsets = [1, 0], sizes = [1, 192], strides = [1, 1]} : vector<2x192xf32> to vector<1x192xf32>
    %28 = vector.shape_cast %27 : vector<1x192xf32> to vector<1x192xf32>
    %29 = vector.broadcast %28 : vector<1x192xf32> to vector<16x192xf32>
    %30 = tpu.concatenate %26, %29 in 0 : vector<16x192xf32>, vector<16x192xf32> -> vector<32x192xf32>
    %31 = vector.extract_strided_slice %30 {offsets = [0, 0], sizes = [32, 64], strides = [1, 1]} : vector<32x192xf32> to vector<32x64xf32>
    %32 = vector.extract_strided_slice %30 {offsets = [0, 64], sizes = [32, 64], strides = [1, 1]} : vector<32x192xf32> to vector<32x64xf32>
    %33 = vector.extract_strided_slice %30 {offsets = [0, 128], sizes = [32, 64], strides = [1, 1]} : vector<32x192xf32> to vector<32x64xf32>
    %cst_9 = arith.constant 1.000000e+00 : f32
    %34 = vector.broadcast %cst_9 : f32 to vector<32x64xf32>
    %35 = arith.addf %34, %32 : vector<32x64xf32>
    %36 = arith.mulf %23, %35 : vector<32x64xf32>
    %37 = arith.addf %36, %31 : vector<32x64xf32>
    %38 = arith.truncf %37 : vector<32x64xf32> to vector<32x64xbf16>
    %c0_10 = arith.constant 0 : index
    %c0_11 = arith.constant 0 : index
    %c0_12 = arith.constant 0 : index
    %39 = vector.load %arg3[%c0_10, %c0_11, %c0_12] : memref<1x64x96xbf16, #tpu.memory_space<vmem>>, vector<1x64x96xbf16>
    %40 = vector.shape_cast %39 : vector<1x64x96xbf16> to vector<64x96xbf16>
    %cst_13 = arith.constant dense<0.000000e+00> : vector<32x96xf32>
    %41 = tpu.matmul %38, %40, %cst_13 {dimension_numbers = #tpu.dot_dimension_numbers<[1], [0], [0], [1], [0, 0, 1, 1], [], []>} : vector<32x64xbf16>, vector<64x96xbf16>, vector<32x96xf32> -> vector<32x96xf32>
    %42 = vector.extract_strided_slice %41 {offsets = [0, 0], sizes = [32, 32], strides = [1, 1]} : vector<32x96xf32> to vector<32x32xf32>
    %43 = vector.extract_strided_slice %41 {offsets = [0, 32], sizes = [32, 32], strides = [1, 1]} : vector<32x96xf32> to vector<32x32xf32>
    %44 = vector.extract_strided_slice %41 {offsets = [0, 64], sizes = [32, 32], strides = [1, 1]} : vector<32x96xf32> to vector<32x32xf32>
    %45 = arith.mulf %42, %42 : vector<32x32xf32>
    %cst_14 = arith.constant dense<0.000000e+00> : vector<32xf32>
    %46 = vector.multi_reduction <add>, %45, %cst_14 [1] : vector<32x32xf32> to vector<32xf32>
    %47 = vector.shape_cast %46 : vector<32xf32> to vector<32x1xf32>
    %cst_15 = arith.constant 3.200000e+01 : f32
    %48 = vector.broadcast %cst_15 : f32 to vector<32x1xf32>
    %49 = arith.divf %47, %48 : vector<32x1xf32>
    %cst_16 = arith.constant 9.99999974E-6 : f32
    %50 = vector.broadcast %cst_16 : f32 to vector<32x1xf32>
    %51 = arith.addf %49, %50 : vector<32x1xf32>
    %52 = math.rsqrt %51 : vector<32x1xf32>
    %53 = vector.broadcast %52 : vector<32x1xf32> to vector<32x32xf32>
    %54 = arith.mulf %42, %53 : vector<32x32xf32>
    %55 = vector.broadcast %3 : vector<1x32xf32> to vector<32x32xf32>
    %56 = arith.mulf %54, %55 : vector<32x32xf32>
    %57 = arith.mulf %43, %43 : vector<32x32xf32>
    %cst_17 = arith.constant dense<0.000000e+00> : vector<32xf32>
    %58 = vector.multi_reduction <add>, %57, %cst_17 [1] : vector<32x32xf32> to vector<32xf32>
    %59 = vector.shape_cast %58 : vector<32xf32> to vector<32x1xf32>
    %cst_18 = arith.constant 3.200000e+01 : f32
    %60 = vector.broadcast %cst_18 : f32 to vector<32x1xf32>
    %61 = arith.divf %59, %60 : vector<32x1xf32>
    %cst_19 = arith.constant 9.99999974E-6 : f32
    %62 = vector.broadcast %cst_19 : f32 to vector<32x1xf32>
    %63 = arith.addf %61, %62 : vector<32x1xf32>
    %64 = math.rsqrt %63 : vector<32x1xf32>
    %65 = vector.broadcast %64 : vector<32x1xf32> to vector<32x32xf32>
    %66 = arith.mulf %43, %65 : vector<32x32xf32>
    %67 = vector.broadcast %4 : vector<1x32xf32> to vector<32x32xf32>
    %68 = arith.mulf %66, %67 : vector<32x32xf32>
    %69 = arith.truncf %56 : vector<32x32xf32> to vector<32x32xbf16>
    %70 = arith.truncf %68 : vector<32x32xf32> to vector<32x32xbf16>
    %cst_20 = arith.constant dense<0.000000e+00> : vector<32x32xf32>
    %71 = tpu.matmul %69, %70, %cst_20 {dimension_numbers = #tpu.dot_dimension_numbers<[1], [1], [0], [0], [0, 0, 1, 0], [], []>} : vector<32x32xbf16>, vector<32x32xbf16>, vector<32x32xf32> -> vector<32x32xf32>
    %c0_21 = arith.constant 0 : index
    %c0_22 = arith.constant 0 : index
    %c0_23 = arith.constant 0 : index
    %72 = vector.load %arg5[%c0_21, %c0_22, %c0_23] : memref<1x32x32xf32, #tpu.memory_space<vmem>>, vector<1x32x32xf32>
    %73 = vector.shape_cast %72 : vector<1x32x32xf32> to vector<32x32xf32>
    %74 = arith.addf %71, %73 : vector<32x32xf32>
    %cst_24 = arith.constant dense<0xFF800000> : vector<32xf32>
    %75 = vector.multi_reduction <maximumf>, %74, %cst_24 [1] : vector<32x32xf32> to vector<32xf32>
    %76 = vector.shape_cast %75 : vector<32xf32> to vector<32x1xf32>
    %77 = vector.broadcast %76 : vector<32x1xf32> to vector<32x32xf32>
    %78 = arith.subf %74, %77 : vector<32x32xf32>
    %79 = math.exp %78 : vector<32x32xf32>
    %cst_25 = arith.constant dense<0.000000e+00> : vector<32xf32>
    %80 = vector.multi_reduction <add>, %79, %cst_25 [1] : vector<32x32xf32> to vector<32xf32>
    %81 = vector.shape_cast %80 : vector<32xf32> to vector<32x1xf32>
    %82 = arith.truncf %79 : vector<32x32xf32> to vector<32x32xbf16>
    %83 = arith.truncf %44 : vector<32x32xf32> to vector<32x32xbf16>
    %cst_26 = arith.constant dense<0.000000e+00> : vector<32x32xf32>
    %84 = tpu.matmul %82, %83, %cst_26 {dimension_numbers = #tpu.dot_dimension_numbers<[1], [0], [0], [1], [0, 0, 1, 1], [], []>} : vector<32x32xbf16>, vector<32x32xbf16>, vector<32x32xf32> -> vector<32x32xf32>
    %85 = tpu.reciprocal %81 {approx = true} : vector<32x1xf32> -> vector<32x1xf32>
    %86 = vector.broadcast %85 : vector<32x1xf32> to vector<32x32xf32>
    %87 = arith.mulf %84, %86 : vector<32x32xf32>
    %88 = arith.truncf %87 : vector<32x32xf32> to vector<32x32xbf16>
    %c0_27 = arith.constant 0 : index
    %c0_28 = arith.constant 0 : index
    %c0_29 = arith.constant 0 : index
    %89 = vector.load %arg4[%c0_27, %c0_28, %c0_29] : memref<1x32x64xbf16, #tpu.memory_space<vmem>>, vector<1x32x64xbf16>
    %90 = vector.shape_cast %89 : vector<1x32x64xbf16> to vector<32x64xbf16>
    %cst_30 = arith.constant dense<0.000000e+00> : vector<32x64xf32>
    %91 = tpu.matmul %88, %90, %cst_30 {dimension_numbers = #tpu.dot_dimension_numbers<[1], [0], [0], [1], [0, 0, 1, 1], [], []>} : vector<32x32xbf16>, vector<32x64xbf16>, vector<32x64xf32> -> vector<32x64xf32>
    %92 = vector.broadcast %5 : vector<1x64xf32> to vector<32x64xf32>
    %93 = arith.addf %91, %92 : vector<32x64xf32>
    %94 = arith.mulf %93, %33 : vector<32x64xf32>
    %c0_31 = arith.constant 0 : index
    %c0_32 = arith.constant 0 : index
    %c0_33 = arith.constant 0 : index
    %95 = vector.load %arg7[%c0_31, %c0_32, %c0_33] : memref<1x32x64xf32, #tpu.memory_space<vmem>>, vector<1x32x64xf32>
    %96 = vector.shape_cast %95 : vector<1x32x64xf32> to vector<32x64xf32>
    %97 = vector.shape_cast %94 : vector<32x64xf32> to vector<1x32x64xf32>
    tpu.vector_store %arg7[%c0_31, %c0_32, %c0_33], %97 {strides = array<i32>} : memref<1x32x64xf32, #tpu.memory_space<vmem>>, vector<1x32x64xf32>,
    return
  }
  func.func @transform_0(%arg0: i32) -> (i32, i32) {
    %c0_i32 = arith.constant 0 : i32
    %c0_i32_0 = arith.constant 0 : i32
    %c0_i32_1 = arith.constant 0 : i32
    return %c0_i32, %c0_i32_0 : i32, i32
  }
  func.func @transform_1(%arg0: i32) -> (i32, i32) {
    %c0_i32 = arith.constant 0 : i32
    %c0_i32_0 = arith.constant 0 : i32
    %c0_i32_1 = arith.constant 0 : i32
    return %c0_i32, %c0_i32_0 : i32, i32
  }
  func.func @transform_2(%arg0: i32) -> (i32, i32, i32) {
    %c0_i32 = arith.constant 0 : i32
    %c0_i32_0 = arith.constant 0 : i32
    %c0_i32_1 = arith.constant 0 : i32
    return %arg0, %c0_i32, %c0_i32_0 : i32, i32, i32
  }
  func.func @transform_3(%arg0: i32) -> (i32, i32, i32) {
    %c0_i32 = arith.constant 0 : i32
    %c0_i32_0 = arith.constant 0 : i32
    %c0_i32_1 = arith.constant 0 : i32
    return %arg0, %c0_i32, %c0_i32_0 : i32, i32, i32
  }
  func.func @transform_4(%arg0: i32) -> (i32, i32, i32) {
    %c0_i32 = arith.constant 0 : i32
    %c0_i32_0 = arith.constant 0 : i32
    %c0_i32_1 = arith.constant 0 : i32
    return %arg0, %c0_i32, %c0_i32_0 : i32, i32, i32
  }
  func.func @transform_5(%arg0: i32) -> (i32, i32) {
    %c0_i32 = arith.constant 0 : i32
    %c0_i32_0 = arith.constant 0 : i32
    %c0_i32_1 = arith.constant 0 : i32
    return %c0_i32, %c0_i32_0 : i32, i32
  }
  func.func @transform_6(%arg0: i32) -> (i32, i32, i32) {
    %c0_i32 = arith.constant 0 : i32
    %c0_i32_0 = arith.constant 0 : i32
    %c0_i32_1 = arith.constant 0 : i32
    return %arg0, %c0_i32, %c0_i32_0 : i32, i32, i32
  }
}

</mosaic_0001>

<llo_original>
// kernel: tile.9
$region0: #{tile.9}
  %s0 = inlined_call_operand.vmem [shape: f32[2,2,16,2,16], index: 0, kind: input, shape index: {}]
  %s1 = inlined_call_operand.vmem [shape: f32[2,32,32], index: 1, kind: output, shape index: {}]
  $region1: #{tile.9} parent=0
    #allocation0 [shape = 'u8[262144]{0}', space=vmem, size = 0x40000, scoped, tag = 'scoped mem for input reshape']
    %s3 = ssub.s32 4, 1
    %s4 = scalar_lea.vmem %s0, 126
    %v5 = vld [vmem:[%s4] sm:%s3]
    %s6 = scalar_lea.vmem [#allocation0], 504
    %7 = vst [vmem:[%s6] sm:%s3] %v5
    %s8 = scalar_lea.vmem %s0, 124
    %v9 = vld [vmem:[%s8] sm:%s3]
    %s10 = scalar_lea.vmem [#allocation0], 496
    %11 = vst [vmem:[%s10] sm:%s3] %v9
    %s12 = scalar_lea.vmem %s0, 122
    %v13 = vld [vmem:[%s12] sm:%s3]
    %s14 = scalar_lea.vmem [#allocation0], 488
    %15 = vst [vmem:[%s14] sm:%s3] %v13
    %s16 = scalar_lea.vmem %s0, 120
    %v17 = vld [vmem:[%s16] sm:%s3]
    %s18 = scalar_lea.vmem [#allocation0], 480
    %19 = vst [vmem:[%s18] sm:%s3] %v17
    %s20 = scalar_lea.vmem %s0, 118
    %v21 = vld [vmem:[%s20] sm:%s3]
    %s22 = scalar_lea.vmem [#allocation0], 472
    %23 = vst [vmem:[%s22] sm:%s3] %v21
    %s24 = scalar_lea.vmem %s0, 116
    %v25 = vld [vmem:[%s24] sm:%s3]
    %s26 = scalar_lea.vmem [#allocation0], 464
    %27 = vst [vmem:[%s26] sm:%s3] %v25
    %s28 = scalar_lea.vmem %s0, 114
    %v29 = vld [vmem:[%s28] sm:%s3]
    %s30 = scalar_lea.vmem [#allocation0], 456
    %31 = vst [vmem:[%s30] sm:%s3] %v29
    %s32 = scalar_lea.vmem %s0, 112
    %v33 = vld [vmem:[%s32] sm:%s3]
    %s34 = scalar_lea.vmem [#allocation0], 448
    %35 = vst [vmem:[%s34] sm:%s3] %v33
    %s36 = scalar_lea.vmem %s0, 110
    %v37 = vld [vmem:[%s36] sm:%s3]
    %s38 = scalar_lea.vmem [#allocation0], 440
    %39 = vst [vmem:[%s38] sm:%s3] %v37
    %s40 = scalar_lea.vmem %s0, 108
    %v41 = vld [vmem:[%s40] sm:%s3]
    %s42 = scalar_lea.vmem [#allocation0], 432
    %43 = vst [vmem:[%s42] sm:%s3] %v41
    %s44 = scalar_lea.vmem %s0, 106
    %v45 = vld [vmem:[%s44] sm:%s3]
    %s46 = scalar_lea.vmem [#allocation0], 424
    %47 = vst [vmem:[%s46] sm:%s3] %v45
    %s48 = scalar_lea.vmem %s0, 104
    %v49 = vld [vmem:[%s48] sm:%s3]
    %s50 = scalar_lea.vmem [#allocation0], 416
    %51 = vst [vmem:[%s50] sm:%s3] %v49
    %s52 = scalar_lea.vmem %s0, 102
    %v53 = vld [vmem:[%s52] sm:%s3]
    %s54 = scalar_lea.vmem [#allocation0], 408
    %55 = vst [vmem:[%s54] sm:%s3] %v53
    %s56 = scalar_lea.vmem %s0, 100
    %v57 = vld [vmem:[%s56] sm:%s3]
    %s58 = scalar_lea.vmem [#allocation0], 400
    %59 = vst [vmem:[%s58] sm:%s3] %v57
    %s60 = scalar_lea.vmem %s0, 98
    %v61 = vld [vmem:[%s60] sm:%s3]
    %s62 = scalar_lea.vmem [#allocation0], 392
    %63 = vst [vmem:[%s62] sm:%s3] %v61
    %s64 = scalar_lea.vmem %s0, 96
    %v65 = vld [vmem:[%s64] sm:%s3]
    %s66 = scalar_lea.vmem [#allocation0], 384
    %67 = vst [vmem:[%s66] sm:%s3] %v65
    %s68 = scalar_lea.vmem %s0, 94
    %v69 = vld [vmem:[%s68] sm:%s3]
    %s70 = scalar_lea.vmem [#allocation0], 376
    %71 = vst [vmem:[%s70] sm:%s3] %v69
    %s72 = scalar_lea.vmem %s0, 92
    %v73 = vld [vmem:[%s72] sm:%s3]
    %s74 = scalar_lea.vmem [#allocation0], 368
    %75 = vst [vmem:[%s74] sm:%s3] %v73
    %s76 = scalar_lea.vmem %s0, 90
    %v77 = vld [vmem:[%s76] sm:%s3]
    %s78 = scalar_lea.vmem [#allocation0], 360
    %79 = vst [vmem:[%s78] sm:%s3] %v77
    %s80 = scalar_lea.vmem %s0, 88
    %v81 = vld [vmem:[%s80] sm:%s3]
    %s82 = scalar_lea.vmem [#allocation0], 352
    %83 = vst [vmem:[%s82] sm:%s3] %v81
    %s84 = scalar_lea.vmem %s0, 86
    %v85 = vld [vmem:[%s84] sm:%s3]
    %s86 = scalar_lea.vmem [#allocation0], 344
    %87 = vst [vmem:[%s86] sm:%s3] %v85
    %s88 = scalar_lea.vmem %s0, 84
    %v89 = vld [vmem:[%s88] sm:%s3]
    %s90 = scalar_lea.vmem [#allocation0], 336
    %91 = vst [vmem:[%s90] sm:%s3] %v89
    %s92 = scalar_lea.vmem %s0, 82
    %v93 = vld [vmem:[%s92] sm:%s3]
    %s94 = scalar_lea.vmem [#allocation0], 328
    %95 = vst [vmem:[%s94] sm:%s3] %v93
    %s96 = scalar_lea.vmem %s0, 80
    %v97 = vld [vmem:[%s96] sm:%s3]
    %s98 = scalar_lea.vmem [#allocation0], 320
    %99 = vst [vmem:[%s98] sm:%s3] %v97
    %s100 = scalar_lea.vmem %s0, 78
    %v101 = vld [vmem:[%s100] sm:%s3]
    %s102 = scalar_lea.vmem [#allocation0], 312
    %103 = vst [vmem:[%s102] sm:%s3] %v101
    %s104 = scalar_lea.vmem %s0, 76
    %v105 = vld [vmem:[%s104] sm:%s3]
    %s106 = scalar_lea.vmem [#allocation0], 304
    %107 = vst [vmem:[%s106] sm:%s3] %v105
    %s108 = scalar_lea.vmem %s0, 74
    %v109 = vld [vmem:[%s108] sm:%s3]
    %s110 = scalar_lea.vmem [#allocation0], 296
    %111 = vst [vmem:[%s110] sm:%s3] %v109
    %s112 = scalar_lea.vmem %s0, 72
    %v113 = vld [vmem:[%s112] sm:%s3]
    %s114 = scalar_lea.vmem [#allocation0], 288
    %115 = vst [vmem:[%s114] sm:%s3] %v113
    %s116 = scalar_lea.vmem %s0, 70
    %v117 = vld [vmem:[%s116] sm:%s3]
    %s118 = scalar_lea.vmem [#allocation0], 280
    %119 = vst [vmem:[%s118] sm:%s3] %v117
    %s120 = scalar_lea.vmem %s0, 68
    %v121 = vld [vmem:[%s120] sm:%s3]
    %s122 = scalar_lea.vmem [#allocation0], 272
    %123 = vst [vmem:[%s122] sm:%s3] %v121
    %s124 = scalar_lea.vmem %s0, 66
    %v125 = vld [vmem:[%s124] sm:%s3]
    %s126 = scalar_lea.vmem [#allocation0], 264
    %127 = vst [vmem:[%s126] sm:%s3] %v125
    %s128 = scalar_lea.vmem %s0, 64
    %v129 = vld [vmem:[%s128] sm:%s3]
    %s130 = scalar_lea.vmem [#allocation0], 256
    %131 = vst [vmem:[%s130] sm:%s3] %v129
    %s132 = scalar_lea.vmem %s0, 62
    %v133 = vld [vmem:[%s132] sm:%s3]
    %s134 = scalar_lea.vmem [#allocation0], 248
    %135 = vst [vmem:[%s134] sm:%s3] %v133
    %s136 = scalar_lea.vmem %s0, 60
    %v137 = vld [vmem:[%s136] sm:%s3]
    %s138 = scalar_lea.vmem [#allocation0], 240
    %139 = vst [vmem:[%s138] sm:%s3] %v137
    %s140 = scalar_lea.vmem %s0, 58
    %v141 = vld [vmem:[%s140] sm:%s3]
    %s142 = scalar_lea.vmem [#allocation0], 232
    %143 = vst [vmem:[%s142] sm:%s3] %v141
    %s144 = scalar_lea.vmem %s0, 56
    %v145 = vld [vmem:[%s144] sm:%s3]
    %s146 = scalar_lea.vmem [#allocation0], 224
    %147 = vst [vmem:[%s146] sm:%s3] %v145
    %s148 = scalar_lea.vmem %s0, 54
    %v149 = vld [vmem:[%s148] sm:%s3]
    %s150 = scalar_lea.vmem [#allocation0], 216
    %151 = vst [vmem:[%s150] sm:%s3] %v149
    %s152 = scalar_lea.vmem %s0, 52
    %v153 = vld [vmem:[%s152] sm:%s3]
    %s154 = scalar_lea.vmem [#allocation0], 208
    %155 = vst [vmem:[%s154] sm:%s3] %v153
    %s156 = scalar_lea.vmem %s0, 50
    %v157 = vld [vmem:[%s156] sm:%s3]
    %s158 = scalar_lea.vmem [#allocation0], 200
    %159 = vst [vmem:[%s158] sm:%s3] %v157
    %s160 = scalar_lea.vmem %s0, 48
    %v161 = vld [vmem:[%s160] sm:%s3]
    %s162 = scalar_lea.vmem [#allocation0], 192
    %163 = vst [vmem:[%s162] sm:%s3] %v161
    %s164 = scalar_lea.vmem %s0, 46
    %v165 = vld [vmem:[%s164] sm:%s3]
    %s166 = scalar_lea.vmem [#allocation0], 184
    %167 = vst [vmem:[%s166] sm:%s3] %v165
    %s168 = scalar_lea.vmem %s0, 44
    %v169 = vld [vmem:[%s168] sm:%s3]
    %s170 = scalar_lea.vmem [#allocation0], 176
    %171 = vst [vmem:[%s170] sm:%s3] %v169
    %s172 = scalar_lea.vmem %s0, 42
    %v173 = vld [vmem:[%s172] sm:%s3]
    %s174 = scalar_lea.vmem [#allocation0], 168
    %175 = vst [vmem:[%s174] sm:%s3] %v173
    %s176 = scalar_lea.vmem %s0, 40
    %v177 = vld [vmem:[%s176] sm:%s3]
    %s178 = scalar_lea.vmem [#allocation0], 160
    %179 = vst [vmem:[%s178] sm:%s3] %v177
    %s180 = scalar_lea.vmem %s0, 38
    %v181 = vld [vmem:[%s180] sm:%s3]
    %s182 = scalar_lea.vmem [#allocation0], 152
    %183 = vst [vmem:[%s182] sm:%s3] %v181
    %s184 = scalar_lea.vmem %s0, 36
    %v185 = vld [vmem:[%s184] sm:%s3]
    %s186 = scalar_lea.vmem [#allocation0], 144
    %187 = vst [vmem:[%s186] sm:%s3] %v185
    %s188 = scalar_lea.vmem %s0, 34
    %v189 = vld [vmem:[%s188] sm:%s3]
    %s190 = scalar_lea.vmem [#allocation0], 136
    %191 = vst [vmem:[%s190] sm:%s3] %v189
    %s192 = scalar_lea.vmem %s0, 32
    %v193 = vld [vmem:[%s192] sm:%s3]
    %s194 = scalar_lea.vmem [#allocation0], 128
    %195 = vst [vmem:[%s194] sm:%s3] %v193
    %s196 = scalar_lea.vmem %s0, 30
    %v197 = vld [vmem:[%s196] sm:%s3]
    %s198 = scalar_lea.vmem [#allocation0], 120
    %199 = vst [vmem:[%s198] sm:%s3] %v197
    %s200 = scalar_lea.vmem %s0, 28
    %v201 = vld [vmem:[%s200] sm:%s3]
    %s202 = scalar_lea.vmem [#allocation0], 112
    %203 = vst [vmem:[%s202] sm:%s3] %v201
    %s204 = scalar_lea.vmem %s0, 26
    %v205 = vld [vmem:[%s204] sm:%s3]
    %s206 = scalar_lea.vmem [#allocation0], 104
    %207 = vst [vmem:[%s206] sm:%s3] %v205
    %s208 = scalar_lea.vmem %s0, 24
    %v209 = vld [vmem:[%s208] sm:%s3]
    %s210 = scalar_lea.vmem [#allocation0], 96
    %211 = vst [vmem:[%s210] sm:%s3] %v209
    %s212 = scalar_lea.vmem %s0, 22
    %v213 = vld [vmem:[%s212] sm:%s3]
    %s214 = scalar_lea.vmem [#allocation0], 88
    %215 = vst [vmem:[%s214] sm:%s3] %v213
    %s216 = scalar_lea.vmem %s0, 20
    %v217 = vld [vmem:[%s216] sm:%s3]
    %s218 = scalar_lea.vmem [#allocation0], 80
    %219 = vst [vmem:[%s218] sm:%s3] %v217
    %s220 = scalar_lea.vmem %s0, 18
    %v221 = vld [vmem:[%s220] sm:%s3]
    %s222 = scalar_lea.vmem [#allocation0], 72
    %223 = vst [vmem:[%s222] sm:%s3] %v221
    %s224 = scalar_lea.vmem %s0, 16
    %v225 = vld [vmem:[%s224] sm:%s3]
    %s226 = scalar_lea.vmem [#allocation0], 64
    %227 = vst [vmem:[%s226] sm:%s3] %v225
    %s228 = scalar_lea.vmem %s0, 14
    %v229 = vld [vmem:[%s228] sm:%s3]
    %s230 = scalar_lea.vmem [#allocation0], 56
    %231 = vst [vmem:[%s230] sm:%s3] %v229
    %s232 = scalar_lea.vmem %s0, 12
    %v233 = vld [vmem:[%s232] sm:%s3]
    %s234 = scalar_lea.vmem [#allocation0], 48
    %235 = vst [vmem:[%s234] sm:%s3] %v233
    %s236 = scalar_lea.vmem %s0, 10
    %v237 = vld [vmem:[%s236] sm:%s3]
    %s238 = scalar_lea.vmem [#allocation0], 40
    %239 = vst [vmem:[%s238] sm:%s3] %v237
    %s240 = scalar_lea.vmem %s0, 8
    %v241 = vld [vmem:[%s240] sm:%s3]
    %s242 = scalar_lea.vmem [#allocation0], 32
    %243 = vst [vmem:[%s242] sm:%s3] %v241
    %s244 = scalar_lea.vmem %s0, 6
    %v245 = vld [vmem:[%s244] sm:%s3]
    %s246 = scalar_lea.vmem [#allocation0], 24
    %247 = vst [vmem:[%s246] sm:%s3] %v245
    %s248 = scalar_lea.vmem %s0, 4
    %v249 = vld [vmem:[%s248] sm:%s3]
    %s250 = scalar_lea.vmem [#allocation0], 16
    %251 = vst [vmem:[%s250] sm:%s3] %v249
    %s252 = scalar_lea.vmem %s0, 2
    %v253 = vld [vmem:[%s252] sm:%s3]
    %s254 = scalar_lea.vmem [#allocation0], 8
    %255 = vst [vmem:[%s254] sm:%s3] %v253
    %v256 = vld [vmem:[%s0] sm:%s3]
    %257 = vst [vmem:[#allocation0] sm:%s3] %v256
    %v258 = vld [vmem:[#allocation0] ss:$8 sm:$0xf]
    %v259 = vld [vmem:[#allocation0] ss:$8 sm:$0xf0]
    %vm260 = vcmask 1047556
    %v261 = vsel %vm260, %v259, %v258
    %vm262 = vcmask 130048
    %263 = vst.msk [vmem:[%s1] sm:$0xff] %vm262, %v261
    %s264 = scalar_lea.vmem [#allocation0], 64
    %v265 = vld [vmem:[%s264] ss:$8 sm:$0xf]
    %s266 = scalar_lea.vmem [#allocation0], 64
    %v267 = vld [vmem:[%s266] ss:$8 sm:$0xf0]
    %vm268 = vcmask 1047556
    %v269 = vsel %vm268, %v267, %v265
    %vm270 = vcmask 130048
    %s271 = scalar_lea.vmem %s1, 8
    %272 = vst.msk [vmem:[%s271] sm:$0xff] %vm270, %v269
    %s273 = scalar_lea.vmem [#allocation0], 128
    %v274 = vld [vmem:[%s273] ss:$8 sm:$0xf]
    %s275 = scalar_lea.vmem [#allocation0], 128
    %v276 = vld [vmem:[%s275] ss:$8 sm:$0xf0]
    %vm277 = vcmask 1047556
    %v278 = vsel %vm277, %v276, %v274
    %vm279 = vcmask 130048
    %s280 = scalar_lea.vmem %s1, 16
    %281 = vst.msk [vmem:[%s280] sm:$0xff] %vm279, %v278
    %s282 = scalar_lea.vmem [#allocation0], 192
    %v283 = vld [vmem:[%s282] ss:$8 sm:$0xf]
    %s284 = scalar_lea.vmem [#allocation0], 192
    %v285 = vld [vmem:[%s284] ss:$8 sm:$0xf0]
    %vm286 = vcmask 1047556
    %v287 = vsel %vm286, %v285, %v283
    %vm288 = vcmask 130048
    %s289 = scalar_lea.vmem %s1, 24
    %290 = vst.msk [vmem:[%s289] sm:$0xff] %vm288, %v287
    %s291 = scalar_lea.vmem [#allocation0], 256
    %v292 = vld [vmem:[%s291] ss:$8 sm:$0xf]
    %s293 = scalar_lea.vmem [#allocation0], 256
    %v294 = vld [vmem:[%s293] ss:$8 sm:$0xf0]
    %vm295 = vcmask 1047556
    %v296 = vsel %vm295, %v294, %v292
    %vm297 = vcmask 130048
    %s298 = scalar_lea.vmem %s1, 32
    %299 = vst.msk [vmem:[%s298] sm:$0xff] %vm297, %v296
    %s300 = scalar_lea.vmem [#allocation0], 320
    %v301 = vld [vmem:[%s300] ss:$8 sm:$0xf]
    %s302 = scalar_lea.vmem [#allocation0], 320
    %v303 = vld [vmem:[%s302] ss:$8 sm:$0xf0]
    %vm304 = vcmask 1047556
    %v305 = vsel %vm304, %v303, %v301
    %vm306 = vcmask 130048
    %s307 = scalar_lea.vmem %s1, 40
    %308 = vst.msk [vmem:[%s307] sm:$0xff] %vm306, %v305
    %s309 = scalar_lea.vmem [#allocation0], 384
    %v310 = vld [vmem:[%s309] ss:$8 sm:$0xf]
    %s311 = scalar_lea.vmem [#allocation0], 384
    %v312 = vld [vmem:[%s311] ss:$8 sm:$0xf0]
    %vm313 = vcmask 1047556
    %v314 = vsel %vm313, %v312, %v310
    %vm315 = vcmask 130048
    %s316 = scalar_lea.vmem %s1, 48
    %317 = vst.msk [vmem:[%s316] sm:$0xff] %vm315, %v314
    %s318 = scalar_lea.vmem [#allocation0], 448
    %v319 = vld [vmem:[%s318] ss:$8 sm:$0xf]
    %s320 = scalar_lea.vmem [#allocation0], 448
    %v321 = vld [vmem:[%s320] ss:$8 sm:$0xf0]
    %vm322 = vcmask 1047556
    %v323 = vsel %vm322, %v321, %v319
    %vm324 = vcmask 130048
    %s325 = scalar_lea.vmem %s1, 56
    %326 = vst.msk [vmem:[%s325] sm:$0xff] %vm324, %v323
    %s327 = scalar_lea.vmem [#allocation0], 1
    %v328 = vld [vmem:[%s327] ss:$8 sm:$0xf]
    %s329 = scalar_lea.vmem [#allocation0], 1
    %v330 = vld [vmem:[%s329] ss:$8 sm:$0xf0]
    %vm331 = vcmask 1047556
    %v332 = vsel %vm331, %v330, %v328
    %333 = vrot.lane.b32.xlu0 %v332, 16
    %v334 = vpop.permute.xlu0 %333
    %vm335 = vcmask 261248
    %336 = vst.msk [vmem:[%s1] sm:$0xff] %vm335, %v334
    %s337 = scalar_lea.vmem [#allocation0], 257
    %v338 = vld [vmem:[%s337] ss:$8 sm:$0xf]
    %s339 = scalar_lea.vmem [#allocation0], 257
    %v340 = vld [vmem:[%s339] ss:$8 sm:$0xf0]
    %vm341 = vcmask 1047556
    %v342 = vsel %vm341, %v340, %v338
    %343 = vrot.lane.b32.xlu0 %v342, 16
    %v344 = vpop.permute.xlu0 %343
    %vm345 = vcmask 261248
    %s346 = scalar_lea.vmem %s1, 32
    %347 = vst.msk [vmem:[%s346] sm:$0xff] %vm345, %v344
    %s348 = scalar_lea.vmem [#allocation0], 65
    %v349 = vld [vmem:[%s348] ss:$8 sm:$0xf]
    %s350 = scalar_lea.vmem [#allocation0], 65
    %v351 = vld [vmem:[%s350] ss:$8 sm:$0xf0]
    %vm352 = vcmask 1047556
    %v353 = vsel %vm352, %v351, %v349
    %354 = vrot.lane.b32.xlu0 %v353, 16
    %v355 = vpop.permute.xlu0 %354
    %vm356 = vcmask 261248
    %s357 = scalar_lea.vmem %s1, 8
    %358 = vst.msk [vmem:[%s357] sm:$0xff] %vm356, %v355
    %s359 = scalar_lea.vmem [#allocation0], 321
    %v360 = vld [vmem:[%s359] ss:$8 sm:$0xf]
    %s361 = scalar_lea.vmem [#allocation0], 321
    %v362 = vld [vmem:[%s361] ss:$8 sm:$0xf0]
    %vm363 = vcmask 1047556
    %v364 = vsel %vm363, %v362, %v360
    %365 = vrot.lane.b32.xlu0 %v364, 16
    %v366 = vpop.permute.xlu0 %365
    %vm367 = vcmask 261248
    %s368 = scalar_lea.vmem %s1, 40
    %369 = vst.msk [vmem:[%s368] sm:$0xff] %vm367, %v366
    %s370 = scalar_lea.vmem [#allocation0], 129
    %v371 = vld [vmem:[%s370] ss:$8 sm:$0xf]
    %s372 = scalar_lea.vmem [#allocation0], 129
    %v373 = vld [vmem:[%s372] ss:$8 sm:$0xf0]
    %vm374 = vcmask 1047556
    %v375 = vsel %vm374, %v373, %v371
    %376 = vrot.lane.b32.xlu0 %v375, 16
    %v377 = vpop.permute.xlu0 %376
    %vm378 = vcmask 261248
    %s379 = scalar_lea.vmem %s1, 16
    %380 = vst.msk [vmem:[%s379] sm:$0xff] %vm378, %v377
    %s381 = scalar_lea.vmem [#allocation0], 385
    %v382 = vld [vmem:[%s381] ss:$8 sm:$0xf]
    %s383 = scalar_lea.vmem [#allocation0], 385
    %v384 = vld [vmem:[%s383] ss:$8 sm:$0xf0]
    %vm385 = vcmask 1047556
    %v386 = vsel %vm385, %v384, %v382
    %387 = vrot.lane.b32.xlu0 %v386, 16
    %v388 = vpop.permute.xlu0 %387
    %vm389 = vcmask 261248
    %s390 = scalar_lea.vmem %s1, 48
    %391 = vst.msk [vmem:[%s390] sm:$0xff] %vm389, %v388
    %s392 = scalar_lea.vmem [#allocation0], 193
    %v393 = vld [vmem:[%s392] ss:$8 sm:$0xf]
    %s394 = scalar_lea.vmem [#allocation0], 193
    %v395 = vld [vmem:[%s394] ss:$8 sm:$0xf0]
    %vm396 = vcmask 1047556
    %v397 = vsel %vm396, %v395, %v393
    %398 = vrot.lane.b32.xlu0 %v397, 16
    %v399 = vpop.permute.xlu0 %398
    %vm400 = vcmask 261248
    %s401 = scalar_lea.vmem %s1, 24
    %402 = vst.msk [vmem:[%s401] sm:$0xff] %vm400, %v399
    %s403 = scalar_lea.vmem [#allocation0], 449
    %v404 = vld [vmem:[%s403] ss:$8 sm:$0xf]
    %s405 = scalar_lea.vmem [#allocation0], 449
    %v406 = vld [vmem:[%s405] ss:$8 sm:$0xf0]
    %vm407 = vcmask 1047556
    %v408 = vsel %vm407, %v406, %v404
    %409 = vrot.lane.b32.xlu0 %v408, 16
    %v410 = vpop.permute.xlu0 %409
    %vm411 = vcmask 261248
    %s412 = scalar_lea.vmem %s1, 56
    %413 = vst.msk [vmem:[%s412] sm:$0xff] %vm411, %v410

// kernel: dit_attention_forward.1
$region0: #{dit_attention_forward.1}
  #allocation0 [shape = 'u32[]', space=smem, size = 0x4, offset = 0x4, fixed_abs, tag = 'smem constant byte address 0x4 - core index']
  #allocation1 [shape = 'u32[72,128]{1,0:T(1,128)}', space=vmem, size = 0x9000, scoped, tag = 'internal scratch']
  %s0 = inlined_call_operand.vmem [shape: f32[32,64], index: 0, kind: input, shape index: {}]
  %s1 = inlined_call_operand.vmem [shape: f32[2,192], index: 1, kind: input, shape index: {}]
  %s2 = inlined_call_operand.vmem [shape: bf16[2,64,96], index: 2, kind: input, shape index: {}]
  %s3 = inlined_call_operand.vmem [shape: bf16[2,32,64], index: 3, kind: input, shape index: {}]
  %s4 = inlined_call_operand.vmem [shape: f32[2,32,32], index: 4, kind: input, shape index: {}]
  %s5 = inlined_call_operand.vmem [shape: f32[8,64], index: 5, kind: input, shape index: {}]
  %s6 = inlined_call_operand.vmem [shape: f32[2,32,64], index: 6, kind: output, shape index: {}]
  %s7 = sld [smem:[#allocation0]]
  $region57: #{dit_attention_forward.1} parent=0
    _
  %s9 = ssub.s32 1, %s7
  %s10 = scalar_select 0, %s9, %s7
  loop: start=0, step=1, limit=4
  $region2: #{dit_attention_forward.1} parent=0 // loop_pre_header
    _
  $region3: #{dit_attention_forward.1} parent=0 // loop_header
    %s12 = sphi 0, %s16
    %p13 = scmp.ge.s32.totalorder %s12, 4
    %s20 = sphi 0, %s20
    %s22 = sphi 0, %s20
    %s23 = sphi 0, %s22
    %s37 = sphi 0, %s23
    %s41 = sphi 0, %s41
    %s43 = sphi 0, %s41
    %s44 = sphi 0, %s43
    %s58 = sphi 0, %s44
    %s64 = sphi 0, %s66
    %s67 = sphi 0, %s64
    %s68 = sphi 0, %s67
    %s84 = sphi 0, %s68
    %s90 = sphi 0, %s92
    %s93 = sphi 0, %s90
    %s94 = sphi 0, %s93
    %s110 = sphi 0, %s94
    %s116 = sphi 0, %s118
    %s119 = sphi 0, %s116
    %s120 = sphi 0, %s119
    %s136 = sphi 0, %s120
    %s140 = sphi 0, %s140
    %s142 = sphi 0, %s140
    %s143 = sphi 0, %s142
    %s157 = sphi 0, %s143
    %s163 = sphi 0, %s165
    %s166 = sphi 0, %s163
    %s167 = sphi 0, %s166
    %s183 = sphi 0, %s167
  $region4: #{dit_attention_forward.1} parent=0 // loop_header_branch
    %15 = sbr.rel (%p13) target = $region8
  $region5: #{dit_attention_forward.1} parent=0 // loop_body
    %s17 = ssub.s32 %s12, 1
    %s18 = ssub.s32 %s12, 2
    %s19 = sadd.s32 %s12, 1
    %s21 = sadd.s32 %s20, 1
    %p24 = scmp.eq.s32.totalorder %s12, 1
    %p25 = scmp.ne.s32.totalorder %s20, %s22
    %p26 = scmp.eq.s32.totalorder %s12, 0
    %p27 = por %p25, %p26
    %p28 = scmp.ne.s32.totalorder %s20, %s22
    %p29 = scmp.eq.s32.totalorder %s17, 1
    %p30 = por %p28, %p29
    %p31 = scmp.ne.s32.totalorder %s22, %s23
    %p32 = scmp.eq.s32.totalorder %s17, 0
    %p33 = por %p31, %p32
    %p34 = scmp.ne.s32.totalorder %s22, %s23
    %p35 = scmp.eq.s32.totalorder %s18, 1
    %p36 = por %p34, %p35
    %p38 = scmp.ne.s32.totalorder %s23, %s37
    %p39 = scmp.eq.s32.totalorder %s18, 0
    %p40 = por %p38, %p39
    %s42 = sadd.s32 %s41, 1
    %p45 = scmp.eq.s32.totalorder %s12, 1
    %p46 = scmp.ne.s32.totalorder %s41, %s43
    %p47 = scmp.eq.s32.totalorder %s12, 0
    %p48 = por %p46, %p47
    %p49 = scmp.ne.s32.totalorder %s41, %s43
    %p50 = scmp.eq.s32.totalorder %s17, 1
    %p51 = por %p49, %p50
    %p52 = scmp.ne.s32.totalorder %s43, %s44
    %p53 = scmp.eq.s32.totalorder %s17, 0
    %p54 = por %p52, %p53
    %p55 = scmp.ne.s32.totalorder %s43, %s44
    %p56 = scmp.eq.s32.totalorder %s18, 1
    %p57 = por %p55, %p56
    %p59 = scmp.ne.s32.totalorder %s44, %s58
    %p60 = scmp.eq.s32.totalorder %s18, 0
    %p61 = por %p59, %p60
    %s62 = ssub.s32 %s12, %s19
    %p63 = scmp.eq.s32.totalorder %s62, 0
    %s65 = sadd.s32 %s64, 1
    %s66 = scalar_select %p63, %s64, %s65
    %p69 = pneg %p63
    %p70 = scmp.eq.s32.totalorder %s12, 1
    %p71 = por %p69, %p70
    %p72 = scmp.ne.s32.totalorder %s64, %s67
    %p73 = scmp.eq.s32.totalorder %s12, 0
    %p74 = por %p72, %p73
    %p75 = scmp.ne.s32.totalorder %s64, %s67
    %p76 = scmp.eq.s32.totalorder %s17, 1
    %p77 = por %p75, %p76
    %p78 = scmp.ne.s32.totalorder %s67, %s68
    %p79 = scmp.eq.s32.totalorder %s17, 0
    %p80 = por %p78, %p79
    %p81 = scmp.ne.s32.totalorder %s67, %s68
    %p82 = scmp.eq.s32.totalorder %s18, 1
    %p83 = por %p81, %p82
    %p85 = scmp.ne.s32.totalorder %s68, %s84
    %p86 = scmp.eq.s32.totalorder %s18, 0
    %p87 = por %p85, %p86
    %s88 = ssub.s32 %s12, %s19
    %p89 = scmp.eq.s32.totalorder %s88, 0
    %s91 = sadd.s32 %s90, 1
    %s92 = scalar_select %p89, %s90, %s91
    %p95 = pneg %p89
    %p96 = scmp.eq.s32.totalorder %s12, 1
    %p97 = por %p95, %p96
    %p98 = scmp.ne.s32.totalorder %s90, %s93
    %p99 = scmp.eq.s32.totalorder %s12, 0
    %p100 = por %p98, %p99
    %p101 = scmp.ne.s32.totalorder %s90, %s93
    %p102 = scmp.eq.s32.totalorder %s17, 1
    %p103 = por %p101, %p102
    %p104 = scmp.ne.s32.totalorder %s93, %s94
    %p105 = scmp.eq.s32.totalorder %s17, 0
    %p106 = por %p104, %p105
    %p107 = scmp.ne.s32.totalorder %s93, %s94
    %p108 = scmp.eq.s32.totalorder %s18, 1
    %p109 = por %p107, %p108
    %p111 = scmp.ne.s32.totalorder %s94, %s110
    %p112 = scmp.eq.s32.totalorder %s18, 0
    %p113 = por %p111, %p112
    %s114 = ssub.s32 %s12, %s19
    %p115 = scmp.eq.s32.totalorder %s114, 0
    %s117 = sadd.s32 %s116, 1
    %s118 = scalar_select %p115, %s116, %s117
    %p121 = pneg %p115
    %p122 = scmp.eq.s32.totalorder %s12, 1
    %p123 = por %p121, %p122
    %p124 = scmp.ne.s32.totalorder %s116, %s119
    %p125 = scmp.eq.s32.totalorder %s12, 0
    %p126 = por %p124, %p125
    %p127 = scmp.ne.s32.totalorder %s116, %s119
    %p128 = scmp.eq.s32.totalorder %s17, 1
    %p129 = por %p127, %p128
    %p130 = scmp.ne.s32.totalorder %s119, %s120
    %p131 = scmp.eq.s32.totalorder %s17, 0
    %p132 = por %p130, %p131
    %p133 = scmp.ne.s32.totalorder %s119, %s120
    %p134 = scmp.eq.s32.totalorder %s18, 1
    %p135 = por %p133, %p134
    %p137 = scmp.ne.s32.totalorder %s120, %s136
    %p138 = scmp.eq.s32.totalorder %s18, 0
    %p139 = por %p137, %p138
    %s141 = sadd.s32 %s140, 1
    %p144 = scmp.eq.s32.totalorder %s12, 1
    %p145 = scmp.ne.s32.totalorder %s140, %s142
    %p146 = scmp.eq.s32.totalorder %s12, 0
    %p147 = por %p145, %p146
    %p148 = scmp.ne.s32.totalorder %s140, %s142
    %p149 = scmp.eq.s32.totalorder %s17, 1
    %p150 = por %p148, %p149
    %p151 = scmp.ne.s32.totalorder %s142, %s143
    %p152 = scmp.eq.s32.totalorder %s17, 0
    %p153 = por %p151, %p152
    %p154 = scmp.ne.s32.totalorder %s142, %s143
    %p155 = scmp.eq.s32.totalorder %s18, 1
    %p156 = por %p154, %p155
    %p158 = scmp.ne.s32.totalorder %s143, %s157
    %p159 = scmp.eq.s32.totalorder %s18, 0
    %p160 = por %p158, %p159
    %s161 = ssub.s32 %s12, %s19
    %p162 = scmp.eq.s32.totalorder %s161, 0
    %s164 = sadd.s32 %s163, 1
    %s165 = scalar_select %p162, %s163, %s164
    %p168 = pneg %p162
    %p169 = scmp.eq.s32.totalorder %s12, 1
    %p170 = por %p168, %p169
    %p171 = scmp.ne.s32.totalorder %s163, %s166
    %p172 = scmp.eq.s32.totalorder %s12, 0
    %p173 = por %p171, %p172
    %p174 = scmp.ne.s32.totalorder %s163, %s166
    %p175 = scmp.eq.s32.totalorder %s17, 1
    %p176 = por %p174, %p175
    %p177 = scmp.ne.s32.totalorder %s166, %s167
    %p178 = scmp.eq.s32.totalorder %s17, 0
    %p179 = por %p177, %p178
    %p180 = scmp.ne.s32.totalorder %s166, %s167
    %p181 = scmp.eq.s32.totalorder %s18, 1
    %p182 = por %p180, %p181
    %p184 = scmp.ne.s32.totalorder %s167, %s183
    %p185 = scmp.eq.s32.totalorder %s18, 0
    %p186 = por %p184, %p185
    %p187 = scmp.le.s32.totalorder 1, %s12
    %p188 = scmp.lt.s32.totalorder %s12, 3
    %p189 = pnand %p187, %p188
    %p190 = pneg %p189
    // Predicated region
    $region9: #{dit_attention_forward.1} parent=5 // pred_check
      _
    $region10: #{dit_attention_forward.1} parent=5 // pred_check_branch
      %192 = sbr.rel (%p189) target = $region12
    $region11: #{dit_attention_forward.1} parent=5 // pred_region
      %s193 = ssub.s32 %s12, 1
      // Predicated region
      $region13: #{dit_attention_forward.1} parent=11 // pred_check
        %p194 = pneg %p33
      $region14: #{dit_attention_forward.1} parent=11 // pred_check_branch
        %196 = sbr.rel (%p194) target = $region16
      $region15: #{dit_attention_forward.1} parent=11 // pred_region
        _
      $region16: #{dit_attention_forward.1} parent=11 // pred_fallthru
        _
      // Predicated region
      $region17: #{dit_attention_forward.1} parent=11 // pred_check
        %p197 = pneg %p54
      $region18: #{dit_attention_forward.1} parent=11 // pred_check_branch
        %199 = sbr.rel (%p197) target = $region20
      $region19: #{dit_attention_forward.1} parent=11 // pred_region
        _
      $region20: #{dit_attention_forward.1} parent=11 // pred_fallthru
        _
      // Predicated region
      $region21: #{dit_attention_forward.1} parent=11 // pred_check
        %p200 = pneg %p153
      $region22: #{dit_attention_forward.1} parent=11 // pred_check_branch
        %202 = sbr.rel (%p200) target = $region24
      $region23: #{dit_attention_forward.1} parent=11 // pred_region
        _
      $region24: #{dit_attention_forward.1} parent=11 // pred_fallthru
        _
    $region12: #{dit_attention_forward.1} parent=5 // pred_fallthru
      _
    %p203 = scmp.lt.s32.totalorder %s12, 2
    // Predicated region
    $region25: #{dit_attention_forward.1} parent=5 // pred_check
      %p204 = pneg %p203
    $region26: #{dit_attention_forward.1} parent=5 // pred_check_branch
      %206 = sbr.rel (%p204) target = $region28
    $region27: #{dit_attention_forward.1} parent=5 // pred_region
      // Predicated region
      $region29: #{dit_attention_forward.1} parent=27 // pred_check
        %p207 = pneg %p74
      $region30: #{dit_attention_forward.1} parent=27 // pred_check_branch
        %209 = sbr.rel (%p207) target = $region32
      $region31: #{dit_attention_forward.1} parent=27 // pred_region
        %p210 = scmp.lt.s32.totalorder %s12, 1
        %s211 = scalar_select %p210, %s12, 1
        %s212 = smul.addr %s211, 8
        %s213 = smul.addr %s212, 4
        %s214 = scalar_lea.vmem %s2, %s213
      $region32: #{dit_attention_forward.1} parent=27 // pred_fallthru
        _
      // Predicated region
      $region33: #{dit_attention_forward.1} parent=27 // pred_check
        %p215 = pneg %p100
      $region34: #{dit_attention_forward.1} parent=27 // pred_check_branch
        %217 = sbr.rel (%p215) target = $region36
      $region35: #{dit_attention_forward.1} parent=27 // pred_region
        %p218 = scmp.lt.s32.totalorder %s12, 1
        %s219 = scalar_select %p218, %s12, 1
        %s220 = smul.addr %s219, 4
        %s221 = smul.addr %s220, 4
        %s222 = scalar_lea.vmem %s3, %s221
      $region36: #{dit_attention_forward.1} parent=27 // pred_fallthru
        _
      // Predicated region
      $region37: #{dit_attention_forward.1} parent=27 // pred_check
        %p223 = pneg %p126
      $region38: #{dit_attention_forward.1} parent=27 // pred_check_branch
        %225 = sbr.rel (%p223) target = $region40
      $region39: #{dit_attention_forward.1} parent=27 // pred_region
        %p226 = scmp.lt.s32.totalorder %s12, 1
        %s227 = scalar_select %p226, %s12, 1
        %s228 = smul.addr %s227, 4
        %s229 = smul.addr %s228, 8
        %s230 = scalar_lea.vmem %s4, %s229
      $region40: #{dit_attention_forward.1} parent=27 // pred_fallthru
        _
    $region28: #{dit_attention_forward.1} parent=5 // pred_fallthru
      _
    %p231 = scmp.le.s32.totalorder 1, %s12
    %p232 = scmp.lt.s32.totalorder %s12, 3
    %p233 = pnand %p231, %p232
    %p234 = pneg %p233
    // Predicated region
    $region41: #{dit_attention_forward.1} parent=5 // pred_check
      _
    $region42: #{dit_attention_forward.1} parent=5 // pred_check_branch
      %236 = sbr.rel (%p233) target = $region44
    $region43: #{dit_attention_forward.1} parent=5 // pred_region
      %s237 = ssub.s32 %s12, 1
      %p238 = pneg %p33
      %p239 = pneg %p30
      %p240 = pneg %p54
      %p241 = pneg %p51
      %p242 = scmp.lt.s32.totalorder %s17, 1
      %s243 = scalar_select %p242, %s17, 1
      %s244 = smul.addr %s243, 8
      %s245 = smul.addr %s244, 4
      %s246 = scalar_lea.vmem %s2, %s245
      %p247 = pneg %p80
      %p248 = pneg %p77
      %p249 = scmp.lt.s32.totalorder %s17, 1
      %s250 = scalar_select %p249, %s17, 1
      %s251 = smul.addr %s250, 4
      %s252 = smul.addr %s251, 4
      %s253 = scalar_lea.vmem %s3, %s252
      %p254 = pneg %p106
      %p255 = pneg %p103
      %p256 = scmp.lt.s32.totalorder %s17, 1
      %s257 = scalar_select %p256, %s17, 1
      %s258 = smul.addr %s257, 4
      %s259 = smul.addr %s258, 8
      %s260 = scalar_lea.vmem %s4, %s259
      %p261 = pneg %p132
      %p262 = pneg %p129
      %p263 = pneg %p153
      %p264 = pneg %p150
      %p265 = pneg %p179
      %p266 = pneg %p176
      %p267 = scmp.lt.s32.totalorder %s17, 1
      %s268 = scalar_select %p267, %s17, 1
      %s269 = smul.addr %s268, 4
      %s270 = smul.addr %s269, 8
      %s271 = scalar_lea.vmem %s6, %s270
      %p272 = scmp.lt.s32.totalorder %s17, 1
      %s273 = scalar_select %p272, %s17, 1
      %s274 = smul.addr %s273, 8
      %s275 = smul.addr %s274, 4
      %s276 = scalar_lea.vmem %s2, %s275
      %p277 = scmp.lt.s32.totalorder %s17, 1
      %s278 = scalar_select %p277, %s17, 1
      %s279 = smul.addr %s278, 4
      %s280 = smul.addr %s279, 4
      %s281 = scalar_lea.vmem %s3, %s280
      %p282 = scmp.lt.s32.totalorder %s17, 1
      %s283 = scalar_select %p282, %s17, 1
      %s284 = smul.addr %s283, 4
      %s285 = smul.addr %s284, 8
      %s286 = scalar_lea.vmem %s4, %s285
      %p287 = scmp.lt.s32.totalorder %s17, 1
      %s288 = scalar_select %p287, %s17, 1
      %s289 = smul.addr %s288, 4
      %s290 = smul.addr %s289, 8
      %s291 = scalar_lea.vmem %s6, %s290
      %v293 = vld [vmem:[%s0] sm:$0xff]
      %v294 = vld [vmem:[%s0 + $0x8] sm:$0xff]
      %v295 = vld [vmem:[%s0 + $0x10] sm:$0xff]
      %v296 = vld [vmem:[%s0 + $0x18] sm:$0xff]
      %v297 = vld [vmem:[%s1] sm:$0xf]
      %v298 = vld [vmem:[%s5] sm:$0xff]
      %vm299 = vcmask 523264
      %v300 = vsel %vm299, %v293, 0.0
      %301 = vadd.xlane.f32.xlu0 %v300
      %v302 = vpop.xlane.xlu0 %301
      %v303 = vsel %vm299, %v294, 0.0
      %304 = vadd.xlane.f32.xlu0 %v303
      %v305 = vpop.xlane.xlu0 %304
      %v306 = vsel %vm299, %v295, 0.0
      %307 = vadd.xlane.f32.xlu0 %v306
      %v308 = vpop.xlane.xlu0 %307
      %v309 = vsel %vm299, %v296, 0.0
      %310 = vadd.xlane.f32.xlu0 %v309
      %v311 = vpop.xlane.xlu0 %310
      %v312 = vrcp.pop 64.0
      %v313 = vmul.f32 64.0, %v312
      %v314 = vsub.f32 1.0, %v313
      %v315 = vmul.f32 %v312, %v314
      %v316 = vadd.f32 %v312, %v315
      %vm317 = vweird.f32 %v312
      %v318 = vsel %vm317, %v312, %v316
      %v319 = vmul.f32 %v302, %v318
      %v320 = vmul.f32 %v305, %v318
      %v321 = vmul.f32 %v308, %v318
      %v322 = vmul.f32 %v311, %v318
      %v323 = vsub.f32 %v293, %v319
      %v324 = vsub.f32 %v294, %v320
      %v325 = vsub.f32 %v295, %v321
      %v326 = vsub.f32 %v296, %v322
      %v327 = vmul.f32 %v323, %v323
      %v328 = vmul.f32 %v324, %v324
      %v329 = vmul.f32 %v325, %v325
      %v330 = vmul.f32 %v326, %v326
      %v331 = vsel %vm299, %v327, 0.0
      %332 = vadd.xlane.f32.xlu0 %v331
      %v333 = vpop.xlane.xlu0 %332
      %v334 = vsel %vm299, %v328, 0.0
      %335 = vadd.xlane.f32.xlu0 %v334
      %v336 = vpop.xlane.xlu0 %335
      %v337 = vsel %vm299, %v329, 0.0
      %338 = vadd.xlane.f32.xlu0 %v337
      %v339 = vpop.xlane.xlu0 %338
      %v340 = vsel %vm299, %v330, 0.0
      %341 = vadd.xlane.f32.xlu0 %v340
      %v342 = vpop.xlane.xlu0 %341
      %v343 = vmul.f32 %v333, %v318
      %v344 = vmul.f32 %v336, %v318
      %v345 = vmul.f32 %v339, %v318
      %v346 = vmul.f32 %v342, %v318
      %v347 = vadd.f32 %v343, 1e-05
      %v348 = vadd.f32 %v344, 1e-05
      %v349 = vadd.f32 %v345, 1e-05
      %v350 = vadd.f32 %v346, 1e-05
      %v351 = vrsqrt.pop %v347
      %v352 = vmul.f32 %v351, %v347
      %v353 = vmul.f32 %v352, %v351
      %v354 = vmul.f32 0.5, %v353
      %v355 = vsub.f32 1.5, %v354
      %v356 = vmul.f32 %v351, %v355
      %vm357 = vweird.f32 %v347
      %vm358 = vweird.f32 %v351
      %vm359 = vmor %vm357, %vm358
      %v360 = vsel %vm359, %v351, %v356
      %v361 = vrsqrt.pop %v348
      %v362 = vmul.f32 %v361, %v348
      %v363 = vmul.f32 %v362, %v361
      %v364 = vmul.f32 0.5, %v363
      %v365 = vsub.f32 1.5, %v364
      %v366 = vmul.f32 %v361, %v365
      %vm367 = vweird.f32 %v348
      %vm368 = vweird.f32 %v361
      %vm369 = vmor %vm367, %vm368
      %v370 = vsel %vm369, %v361, %v366
      %v371 = vrsqrt.pop %v349
      %v372 = vmul.f32 %v371, %v349
      %v373 = vmul.f32 %v372, %v371
      %v374 = vmul.f32 0.5, %v373
      %v375 = vsub.f32 1.5, %v374
      %v376 = vmul.f32 %v371, %v375
      %vm377 = vweird.f32 %v349
      %vm378 = vweird.f32 %v371
      %vm379 = vmor %vm377, %vm378
      %v380 = vsel %vm379, %v371, %v376
      %v381 = vrsqrt.pop %v350
      %v382 = vmul.f32 %v381, %v350
      %v383 = vmul.f32 %v382, %v381
      %v384 = vmul.f32 0.5, %v383
      %v385 = vsub.f32 1.5, %v384
      %v386 = vmul.f32 %v381, %v385
      %vm387 = vweird.f32 %v350
      %vm388 = vweird.f32 %v381
      %vm389 = vmor %vm387, %vm388
      %v390 = vsel %vm389, %v381, %v386
      %v391 = vmul.f32 %v323, %v360
      %v392 = vmul.f32 %v324, %v370
      %v393 = vmul.f32 %v325, %v380
      %v394 = vmul.f32 %v326, %v390
      %v396 = vperm.slane %v297, 0
      %v397 = vperm.slane %v297, 2
      %v400 = vperm.slane %v396, 0
      %v401 = vperm.slane %v397, 0
      %v402 = vperm.slane %v297, 1
      %v403 = vperm.slane %v297, 3
      %v406 = vperm.slane %v402, 1
      %v407 = vperm.slane %v403, 1
      %v408 = vadd.f32 %v400, 1.0
      %v409 = vadd.f32 %v406, 1.0
      %412 = vrot.lane.b32.xlu0 %v408, 64
      %v413 = vpop.permute.xlu0 %412
      %414 = vrot.lane.b32.xlu0 %v409, 64
      %v415 = vpop.permute.xlu0 %414
      %v418 = vmul.f32 %v391, %v413
      %v419 = vmul.f32 %v392, %v413
      %v420 = vmul.f32 %v393, %v415
      %v421 = vmul.f32 %v394, %v415
      %v422 = vadd.f32 %v418, %v400
      %v423 = vadd.f32 %v419, %v400
      %v424 = vadd.f32 %v420, %v406
      %v425 = vadd.f32 %v421, %v406
      %v426 = vpack.c.bf16 %v423, %v422
      %v427 = vpack.c.bf16 %v425, %v424
      %v428 = vld [vmem:[%s276] sm:$0xf]
      %v429 = vld [vmem:[%s276 + $0x4] sm:$0xf]
      %v430 = vld [vmem:[%s276 + $0x8] sm:$0xf]
      %v431 = vld [vmem:[%s276 + $0xc] sm:$0xf]
      %v432 = vld [vmem:[%s276 + $0x10] sm:$0xf]
      %v433 = vld [vmem:[%s276 + $0x14] sm:$0xf]
      %v434 = vld [vmem:[%s276 + $0x18] sm:$0xf]
      %v435 = vld [vmem:[%s276 + $0x1c] sm:$0xf]
      %v444 = vunpack.c.l.b16 %v428
      %v445 = vunpack.c.l.b16 %v429
      %v446 = vunpack.c.l.b16 %v430
      %v447 = vunpack.c.l.b16 %v431
      %v448 = vunpack.c.l.b16 %v432
      %v449 = vunpack.c.l.b16 %v433
      %v450 = vunpack.c.l.b16 %v434
      %v451 = vunpack.c.l.b16 %v435
      %v452 = vpack.c.b16 %v445, %v444
      %v453 = vpack.c.b16 %v447, %v446
      %v454 = vpack.c.b16 %v449, %v448
      %v455 = vpack.c.b16 %v451, %v450
      %v461 = vsel %vm299, %v426, 0
      %v464 = vsel %vm299, %v427, 0
      %466 = vmatpush.bf16.msra.mxu0 0
      %467 = vmatpush.bf16.msra.mxu0 0
      %468 = vmatpush.bf16.msra.mxu0 0
      %469 = vmatpush.bf16.msra.mxu0 0
      %470 = vmatpush.bf16.msra.mxu0 %v455
      %471 = vmatpush.bf16.msra.mxu0 %v454
      %472 = vmatpush.bf16.msra.mxu0 %v453
      %473 = vmatpush.bf16.msra.mxu0 %v452
      %474 = vmatmul.bf16.gmra.mxu0 %v461
      %v475 = vpop.f32.mrf.mxu0
      %v476 = vadd.f32 0.0, %v475
      %v477 = vpop.f32.mrf.mxu0
      %v478 = vadd.f32 0.0, %v477
      %479 = vmatmul.bf16.gmra.mxu0 %v464
      %v480 = vpop.f32.mrf.mxu0
      %v481 = vadd.f32 0.0, %v480
      %v482 = vpop.f32.mrf.mxu0
      %v483 = vadd.f32 0.0, %v482
      %484 = vdwg.mxu0
      %v485 = vmul.f32 %v476, %v476
      %v486 = vmul.f32 %v478, %v478
      %v487 = vmul.f32 %v481, %v481
      %v488 = vmul.f32 %v483, %v483
      %vm489 = vcmask 261120
      %v490 = vsel %vm489, %v485, 0.0
      %491 = vadd.xlane.f32.xlu0 %v490
      %v492 = vpop.xlane.xlu0 %491
      %v493 = vsel %vm489, %v486, 0.0
      %494 = vadd.xlane.f32.xlu0 %v493
      %v495 = vpop.xlane.xlu0 %494
      %v496 = vsel %vm489, %v487, 0.0
      %497 = vadd.xlane.f32.xlu0 %v496
      %v498 = vpop.xlane.xlu0 %497
      %v499 = vsel %vm489, %v488, 0.0
      %500 = vadd.xlane.f32.xlu0 %v499
      %v501 = vpop.xlane.xlu0 %500
      %v502 = vrcp.pop 32.0
      %v503 = vmul.f32 32.0, %v502
      %v504 = vsub.f32 1.0, %v503
      %v505 = vmul.f32 %v502, %v504
      %v506 = vadd.f32 %v502, %v505
      %vm507 = vweird.f32 %v502
      %v508 = vsel %vm507, %v502, %v506
      %v509 = vmul.f32 %v492, %v508
      %v510 = vmul.f32 %v495, %v508
      %v511 = vmul.f32 %v498, %v508
      %v512 = vmul.f32 %v501, %v508
      %v513 = vadd.f32 %v509, 1e-05
      %v514 = vadd.f32 %v510, 1e-05
      %v515 = vadd.f32 %v511, 1e-05
      %v516 = vadd.f32 %v512, 1e-05
      %v517 = vrsqrt.pop %v513
      %v518 = vmul.f32 %v517, %v513
      %v519 = vmul.f32 %v518, %v517
      %v520 = vmul.f32 0.5, %v519
      %v521 = vsub.f32 1.5, %v520
      %v522 = vmul.f32 %v517, %v521
      %vm523 = vweird.f32 %v513
      %vm524 = vweird.f32 %v517
      %vm525 = vmor %vm523, %vm524
      %v526 = vsel %vm525, %v517, %v522
      %v527 = vrsqrt.pop %v514
      %v528 = vmul.f32 %v527, %v514
      %v529 = vmul.f32 %v528, %v527
      %v530 = vmul.f32 0.5, %v529
      %v531 = vsub.f32 1.5, %v530
      %v532 = vmul.f32 %v527, %v531
      %vm533 = vweird.f32 %v514
      %vm534 = vweird.f32 %v527
      %vm535 = vmor %vm533, %vm534
      %v536 = vsel %vm535, %v527, %v532
      %v537 = vrsqrt.pop %v515
      %v538 = vmul.f32 %v537, %v515
      %v539 = vmul.f32 %v538, %v537
      %v540 = vmul.f32 0.5, %v539
      %v541 = vsub.f32 1.5, %v540
      %v542 = vmul.f32 %v537, %v541
      %vm543 = vweird.f32 %v515
      %vm544 = vweird.f32 %v537
      %vm545 = vmor %vm543, %vm544
      %v546 = vsel %vm545, %v537, %v542
      %v547 = vrsqrt.pop %v516
      %v548 = vmul.f32 %v547, %v516
      %v549 = vmul.f32 %v548, %v547
      %v550 = vmul.f32 0.5, %v549
      %v551 = vsub.f32 1.5, %v550
      %v552 = vmul.f32 %v547, %v551
      %vm553 = vweird.f32 %v516
      %vm554 = vweird.f32 %v547
      %vm555 = vmor %vm553, %vm554
      %v556 = vsel %vm555, %v547, %v552
      %v557 = vmul.f32 %v476, %v526
      %v558 = vmul.f32 %v478, %v536
      %v559 = vmul.f32 %v481, %v546
      %v560 = vmul.f32 %v483, %v556
      %v561 = vperm.slane %v298, 0
      %v562 = vmul.f32 %v557, %v561
      %v563 = vmul.f32 %v558, %v561
      %v564 = vmul.f32 %v559, %v561
      %v565 = vmul.f32 %v560, %v561
      %570 = vrot.lane.b32.xlu0 %v485, 96
      %v571 = vpop.permute.xlu0 %570
      %572 = vrot.lane.b32.xlu0 %v486, 96
      %v573 = vpop.permute.xlu0 %572
      %574 = vrot.lane.b32.xlu0 %v487, 96
      %v575 = vpop.permute.xlu0 %574
      %576 = vrot.lane.b32.xlu0 %v488, 96
      %v577 = vpop.permute.xlu0 %576
      %v582 = vsel %vm489, %v571, 0.0
      %583 = vadd.xlane.f32.xlu0 %v582
      %v584 = vpop.xlane.xlu0 %583
      %v585 = vsel %vm489, %v573, 0.0
      %586 = vadd.xlane.f32.xlu0 %v585
      %v587 = vpop.xlane.xlu0 %586
      %v588 = vsel %vm489, %v575, 0.0
      %589 = vadd.xlane.f32.xlu0 %v588
      %v590 = vpop.xlane.xlu0 %589
      %v591 = vsel %vm489, %v577, 0.0
      %592 = vadd.xlane.f32.xlu0 %v591
      %v593 = vpop.xlane.xlu0 %592
      %v594 = vmul.f32 %v584, %v508
      %v595 = vmul.f32 %v587, %v508
      %v596 = vmul.f32 %v590, %v508
      %v597 = vmul.f32 %v593, %v508
      %v598 = vadd.f32 %v594, 1e-05
      %v599 = vadd.f32 %v595, 1e-05
      %v600 = vadd.f32 %v596, 1e-05
      %v601 = vadd.f32 %v597, 1e-05
      %v602 = vrsqrt.pop %v598
      %v603 = vmul.f32 %v602, %v598
      %v604 = vmul.f32 %v603, %v602
      %v605 = vmul.f32 0.5, %v604
      %v606 = vsub.f32 1.5, %v605
      %v607 = vmul.f32 %v602, %v606
      %vm608 = vweird.f32 %v598
      %vm609 = vweird.f32 %v602
      %vm610 = vmor %vm608, %vm609
      %v611 = vsel %vm610, %v602, %v607
      %v612 = vrsqrt.pop %v599
      %v613 = vmul.f32 %v612, %v599
      %v614 = vmul.f32 %v613, %v612
      %v615 = vmul.f32 0.5, %v614
      %v616 = vsub.f32 1.5, %v615
      %v617 = vmul.f32 %v612, %v616
      %vm618 = vweird.f32 %v599
      %vm619 = vweird.f32 %v612
      %vm620 = vmor %vm618, %vm619
      %v621 = vsel %vm620, %v612, %v617
      %v622 = vrsqrt.pop %v600
      %v623 = vmul.f32 %v622, %v600
      %v624 = vmul.f32 %v623, %v622
      %v625 = vmul.f32 0.5, %v624
      %v626 = vsub.f32 1.5, %v625
      %v627 = vmul.f32 %v622, %v626
      %vm628 = vweird.f32 %v600
      %vm629 = vweird.f32 %v622
      %vm630 = vmor %vm628, %vm629
      %v631 = vsel %vm630, %v622, %v627
      %v632 = vrsqrt.pop %v601
      %v633 = vmul.f32 %v632, %v601
      %v634 = vmul.f32 %v633, %v632
      %v635 = vmul.f32 0.5, %v634
      %v636 = vsub.f32 1.5, %v635
      %v637 = vmul.f32 %v632, %v636
      %vm638 = vweird.f32 %v601
      %vm639 = vweird.f32 %v632
      %vm640 = vmor %vm638, %vm639
      %v641 = vsel %vm640, %v632, %v637
      %v642 = vmul.f32 %v476, %v611
      %v643 = vmul.f32 %v478, %v621
      %v644 = vmul.f32 %v481, %v631
      %v645 = vmul.f32 %v483, %v641
      %v646 = vperm.slane %v298, 1
      %648 = vrot.lane.b32.xlu0 %v646, 32
      %v649 = vpop.permute.xlu0 %648
      %v651 = vmul.f32 %v642, %v649
      %v652 = vmul.f32 %v643, %v649
      %v653 = vmul.f32 %v644, %v649
      %v654 = vmul.f32 %v645, %v649
      %v655 = vpack.c.bf16 %v563, %v562
      %v656 = vpack.c.bf16 %v565, %v564
      %v657 = vpack.c.bf16 %v652, %v651
      %v658 = vpack.c.bf16 %v654, %v653
      %v659 = vld [vmem:[%s286] sm:$0xff]
      %v660 = vld [vmem:[%s286 + $0x8] sm:$0xff]
      %v661 = vld [vmem:[%s286 + $0x10] sm:$0xff]
      %v662 = vld [vmem:[%s286 + $0x18] sm:$0xff]
      %665 = vrot.lane.b32.xlu0 %v657, 96
      %v666 = vpop.permute.xlu0 %665
      %667 = vrot.lane.b32.xlu0 %v658, 96
      %v668 = vpop.permute.xlu0 %667
      %v670 = vsel %vm489, %v655, 0
      %v673 = vsel %vm489, %v656, 0
      %v676 = vsel %vm489, %v666, 0
      %v679 = vsel %vm489, %v668, 0
      %681 = vmatpush.bf16.xpose.msra.mxu0 0
      %682 = vmatpush.bf16.xpose.msra.mxu0 0
      %683 = vmatpush.bf16.xpose.msra.mxu0 0
      %684 = vmatpush.bf16.xpose.msra.mxu0 0
      %685 = vmatpush.bf16.xpose.msra.mxu0 0
      %686 = vmatpush.bf16.xpose.msra.mxu0 0
      %687 = vmatpush.bf16.xpose.msra.mxu0 %v679
      %688 = vmatpush.bf16.xpose.msra.mxu0 %v676
      %689 = vmatmul.bf16.gmra.mxu0 %v670
      %v690 = vpop.f32.mrf.mxu0
      %v691 = vadd.f32 %v659, %v690
      %v692 = vpop.f32.mrf.mxu0
      %v693 = vadd.f32 %v660, %v692
      %694 = vmatmul.bf16.gmra.mxu0 %v673
      %v695 = vpop.f32.mrf.mxu0
      %v696 = vadd.f32 %v661, %v695
      %v697 = vpop.f32.mrf.mxu0
      %v698 = vadd.f32 %v662, %v697
      %699 = vdwg.mxu0
      %v700 = vsel %vm489, %v691, -inf
      %701 = vmax.xlane.f32.xlu0 %v700
      %v702 = vpop.xlane.xlu0 %701
      %v703 = vsel %vm489, %v693, -inf
      %704 = vmax.xlane.f32.xlu0 %v703
      %v705 = vpop.xlane.xlu0 %704
      %v706 = vsel %vm489, %v696, -inf
      %707 = vmax.xlane.f32.xlu0 %v706
      %v708 = vpop.xlane.xlu0 %707
      %v709 = vsel %vm489, %v698, -inf
      %710 = vmax.xlane.f32.xlu0 %v709
      %v711 = vpop.xlane.xlu0 %710
      %v712 = vsub.f32 %v691, %v702
      %v713 = vsub.f32 %v693, %v705
      %v714 = vsub.f32 %v696, %v708
      %v715 = vsub.f32 %v698, %v711
      %v716 = vmul.f32 %v712, 1.442695
      %v717 = vpow.pop %v716
      %v718 = vmul.f32 %v713, 1.442695
      %v719 = vpow.pop %v718
      %v720 = vmul.f32 %v714, 1.442695
      %v721 = vpow.pop %v720
      %v722 = vmul.f32 %v715, 1.442695
      %v723 = vpow.pop %v722
      %v724 = vsel %vm489, %v717, 0.0
      %725 = vadd.xlane.f32.xlu0 %v724
      %v726 = vpop.xlane.xlu0 %725
      %v727 = vsel %vm489, %v719, 0.0
      %728 = vadd.xlane.f32.xlu0 %v727
      %v729 = vpop.xlane.xlu0 %728
      %v730 = vsel %vm489, %v721, 0.0
      %731 = vadd.xlane.f32.xlu0 %v730
      %v732 = vpop.xlane.xlu0 %731
      %v733 = vsel %vm489, %v723, 0.0
      %734 = vadd.xlane.f32.xlu0 %v733
      %v735 = vpop.xlane.xlu0 %734
      %v736 = vpack.c.bf16 %v719, %v717
      %v737 = vpack.c.bf16 %v723, %v721
      %v738 = vpack.c.bf16 %v478, %v476
      %v739 = vpack.c.bf16 %v483, %v481
      %742 = vrot.lane.b32.xlu0 %v738, 64
      %v743 = vpop.permute.xlu0 %742
      %744 = vrot.lane.b32.xlu0 %v739, 64
      %v745 = vpop.permute.xlu0 %744
      %v749 = vsel %vm489, %v736, 0
      %v752 = vsel %vm489, %v737, 0
      %754 = vmatpush.bf16.msra.mxu0 0
      %755 = vmatpush.bf16.msra.mxu0 0
      %756 = vmatpush.bf16.msra.mxu0 0
      %757 = vmatpush.bf16.msra.mxu0 0
      %758 = vmatpush.bf16.msra.mxu0 0
      %759 = vmatpush.bf16.msra.mxu0 0
      %760 = vmatpush.bf16.msra.mxu0 %v745
      %761 = vmatpush.bf16.msra.mxu0 %v743
      %762 = vmatmul.bf16.gmra.mxu0 %v749
      %v763 = vpop.f32.mrf.mxu0
      %v764 = vadd.f32 0.0, %v763
      %v765 = vpop.f32.mrf.mxu0
      %v766 = vadd.f32 0.0, %v765
      %767 = vmatmul.bf16.gmra.mxu0 %v752
      %v768 = vpop.f32.mrf.mxu0
      %v769 = vadd.f32 0.0, %v768
      %v770 = vpop.f32.mrf.mxu0
      %v771 = vadd.f32 0.0, %v770
      %772 = vdwg.mxu0
      %v773 = vrcp.pop %v726
      %v774 = vrcp.pop %v729
      %v775 = vrcp.pop %v732
      %v776 = vrcp.pop %v735
      %v777 = vmul.f32 %v764, %v773
      %v778 = vmul.f32 %v766, %v774
      %v779 = vmul.f32 %v769, %v775
      %v780 = vmul.f32 %v771, %v776
      %v781 = vpack.c.bf16 %v778, %v777
      %v782 = vpack.c.bf16 %v780, %v779
      %v783 = vld [vmem:[%s281] sm:$0xf]
      %v784 = vld [vmem:[%s281 + $0x4] sm:$0xf]
      %v785 = vld [vmem:[%s281 + $0x8] sm:$0xf]
      %v786 = vld [vmem:[%s281 + $0xc] sm:$0xf]
      %v787 = vperm.slane %v298, 2
      %v792 = vunpack.c.l.b16 %v783
      %v793 = vunpack.c.l.b16 %v784
      %v794 = vunpack.c.l.b16 %v785
      %v795 = vunpack.c.l.b16 %v786
      %v796 = vpack.c.b16 %v793, %v792
      %v797 = vpack.c.b16 %v795, %v794
      %v801 = vsel %vm489, %v781, 0
      %v804 = vsel %vm489, %v782, 0
      %806 = vmatpush.bf16.msra.mxu0 0
      %807 = vmatpush.bf16.msra.mxu0 0
      %808 = vmatpush.bf16.msra.mxu0 0
      %809 = vmatpush.bf16.msra.mxu0 0
      %810 = vmatpush.bf16.msra.mxu0 0
      %811 = vmatpush.bf16.msra.mxu0 0
      %812 = vmatpush.bf16.msra.mxu0 %v797
      %813 = vmatpush.bf16.msra.mxu0 %v796
      %814 = vmatmul.bf16.gmra.mxu0 %v801
      %v815 = vpop.f32.mrf.mxu0
      %v816 = vadd.f32 %v787, %v815
      %v817 = vpop.f32.mrf.mxu0
      %v818 = vadd.f32 %v787, %v817
      %819 = vmatmul.bf16.gmra.mxu0 %v804
      %v820 = vpop.f32.mrf.mxu0
      %v821 = vadd.f32 %v787, %v820
      %v822 = vpop.f32.mrf.mxu0
      %v823 = vadd.f32 %v787, %v822
      %824 = vdwg.mxu0
      %v825 = vmul.f32 %v816, %v401
      %v826 = vmul.f32 %v818, %v401
      %v827 = vmul.f32 %v821, %v407
      %v828 = vmul.f32 %v823, %v407
      %829 = vst.msk [vmem:[%s291] sm:$0xff] %vm299, %v825
      %830 = vst.msk [vmem:[%s291 + $0x8] sm:$0xff] %vm299, %v826
      %831 = vst.msk [vmem:[%s291 + $0x10] sm:$0xff] %vm299, %v827
      %832 = vst.msk [vmem:[%s291 + $0x18] sm:$0xff] %vm299, %v828
      %p833 = scmp.lt.s32.totalorder %s17, 1
      %s834 = scalar_select %p833, %s17, 1
      %s835 = smul.addr %s834, 4
      %s836 = smul.addr %s835, 8
      %s837 = scalar_lea.vmem %s6, %s836
      // Predicated region
      $region45: #{dit_attention_forward.1} parent=43 // pred_check
        %p838 = pneg %p176
      $region46: #{dit_attention_forward.1} parent=43 // pred_check_branch
        %840 = sbr.rel (%p838) target = $region48
      $region47: #{dit_attention_forward.1} parent=43 // pred_region
        _
      $region48: #{dit_attention_forward.1} parent=43 // pred_fallthru
        _
    $region44: #{dit_attention_forward.1} parent=5 // pred_fallthru
      _
    %p841 = scmp.le.s32.totalorder 2, %s12
    // Predicated region
    $region49: #{dit_attention_forward.1} parent=5 // pred_check
      %p842 = pneg %p841
    $region50: #{dit_attention_forward.1} parent=5 // pred_check_branch
      %844 = sbr.rel (%p842) target = $region52
    $region51: #{dit_attention_forward.1} parent=5 // pred_region
      %s845 = ssub.s32 %s12, 2
      // Predicated region
      $region53: #{dit_attention_forward.1} parent=51 // pred_check
        %p846 = pneg %p182
      $region54: #{dit_attention_forward.1} parent=51 // pred_check_branch
        %848 = sbr.rel (%p846) target = $region56
      $region55: #{dit_attention_forward.1} parent=51 // pred_region
        %p849 = scmp.lt.s32.totalorder %s18, 1
        %s850 = scalar_select %p849, %s18, 1
        %s851 = smul.addr %s850, 4
        %s852 = smul.addr %s851, 8
        %s853 = scalar_lea.vmem %s6, %s852
      $region56: #{dit_attention_forward.1} parent=51 // pred_fallthru
        _
    $region52: #{dit_attention_forward.1} parent=5 // pred_fallthru
      _
  $region6: #{dit_attention_forward.1} parent=0 // loop_footer
    %s16 = sadd.s32 1, %s12
  $region7: #{dit_attention_forward.1} parent=0 // loop_footer_branch
    %11 = sbr.rel target = $region3
  $region8: #{dit_attention_forward.1} parent=0 // loop_exit
    _

</llo_original>
